<compile_context>
chip_gen: v6e
topology: v6e:2x2x1
jax: 0.10.0
libtpu: 0.0.40
codegen_flags: <defaults>
</compile_context>

<pallas_src>
import functools

import jax
import jax.numpy as jnp
from jax.experimental import pallas as pl
from jax.experimental.pallas import tpu as pltpu


def _round_up(x, m):
    return ((x + m - 1) // m) * m


def _pick_tile(total, cap, step):
    """Largest multiple of `step` that divides `total` and is <= cap."""
    if total <= cap:
        return total
    t = max(step, (cap // step) * step)
    while total % t:
        t -= step
    return t


def _apply_activation(x, activation):
    if activation is None:
        return x
    if activation == "relu":
        return jnp.maximum(x, 0.0)
    if activation == "leaky_relu":
        return jnp.where(x >= 0.0, x, 0.01 * x)
    if activation == "elu":
        # minimum() keeps expm1 off the (discarded) positive side: no inf.
        return jnp.where(x >= 0.0, x, jnp.expm1(jnp.minimum(x, 0.0)))
    if activation == "sigmoid":
        return jax.nn.sigmoid(x)
    if activation == "tanh":
        return jnp.tanh(x)
    raise ValueError(f"unknown activation: {activation}")


# ----------------------------------------------------------------------------
# One-time parameter preprocessing (hoisted out of the forward path).
# ----------------------------------------------------------------------------
def prepare_linear_params(w, b, *, compute_dtype=None):
    """Pad a single Linear's output dim to a multiple of 128 (lane-dense) and
    optionally cast the weight to the MXU compute dtype.  K is left unpadded
    (the single-K fast path uses full-extent K blocks)."""
    d_in, d_out = w.shape
    n_pad = _round_up(d_out, 128)
    w_p = jnp.pad(w, ((0, 0), (0, n_pad - d_out)))
    if compute_dtype is not None:
        w_p = w_p.astype(compute_dtype)
    b_p = jnp.pad(b.astype(jnp.float32).reshape(1, -1),
                  ((0, 0), (0, n_pad - d_out)))
    return {"w": w_p, "b": b_p, "d_out": d_out}


def prepare_mlp_params(weights, biases, *, compute_dtype=None,
                       first_k_pad=None):
    """Pad every layer of an MLP once: N (out) dims to multiples of 128, K
    (in) dims to the previous layer's padded width so intermediates can stay
    padded in VMEM.  The first layer's K stays unpadded (full-extent block on
    x) unless `first_k_pad` is given (used when the MLP consumes another
    MLP's padded output)."""
    assert len(weights) == len(biases) >= 1
    prev_pad = weights[0].shape[0] if first_k_pad is None else first_k_pad
    assert prev_pad >= weights[0].shape[0]
    ws, bs, d_outs = [], [], []
    for w, b in zip(weights, biases):
        d_in, d_out = w.shape
        assert d_in <= prev_pad
        n_pad = _round_up(d_out, 128)
        w_p = jnp.pad(w, ((0, prev_pad - d_in), (0, n_pad - d_out)))
        if compute_dtype is not None:
            w_p = w_p.astype(compute_dtype)
        b_p = jnp.pad(b.astype(jnp.float32).reshape(1, -1),
                      ((0, 0), (0, n_pad - d_out)))
        ws.append(w_p)
        bs.append(b_p)
        d_outs.append(d_out)
        prev_pad = n_pad
    return {"w": ws, "b": bs, "d_out": d_outs, "d_in": weights[0].shape[0]}


def prepare_attention_mlp_params(edge_w, edge_b, gate_w, gate_b, out_w, out_b,
                                 *, compute_dtype=None):
    """Prepare all three MLPs of EquivariantAttention for the fused kernel."""
    edge_p = prepare_mlp_params(edge_w, edge_b, compute_dtype=compute_dtype)
    hid_pad = edge_p["w"][-1].shape[1]        # padded width of out_h
    gate_p = prepare_mlp_params(gate_w, gate_b, compute_dtype=compute_dtype,
                                first_k_pad=hid_pad)
    out_p = prepare_mlp_params(out_w, out_b, compute_dtype=compute_dtype,
                               first_k_pad=hid_pad)
    return {"edge": edge_p, "gate": gate_p, "out": out_p}


# ----------------------------------------------------------------------------
# Kernel 1: fused edge_nn -> {gate_nn, out_nn} chain (one pallas_call).
# All padded weights/biases are grid-invariant full-extent blocks: DMA'd once
# and resident in VMEM; intermediates never touch HBM.
# ----------------------------------------------------------------------------
def _attention_chain_kernel(*refs, n_edge, n_gate, n_out,
                            edge_acts, gate_acts, out_acts):
    idx = 0
    x_ref = refs[idx]; idx += 1
    ew = refs[idx:idx + n_edge]; idx += n_edge
    eb = refs[idx:idx + n_edge]; idx += n_edge
    gw = refs[idx:idx + n_gate]; idx += n_gate
    gb = refs[idx:idx + n_gate]; idx += n_gate
    ow = refs[idx:idx + n_out]; idx += n_out
    ob = refs[idx:idx + n_out]; idx += n_out
    oh_ref, ogate_ref, ovec_ref = refs[idx:idx + 3]

    def run_chain(h, w_refs, b_refs, acts):
        for w_ref, b_ref, act in zip(w_refs, b_refs, acts):
            h = jnp.dot(h.astype(w_ref.dtype), w_ref[...],
                        preferred_element_type=jnp.float32)
            h = _apply_activation(h + b_ref[...], act)
        return h

    h = run_chain(x_ref[...], ew, eb, edge_acts)          # edge_nn
    oh_ref[...] = h.astype(oh_ref.dtype)
    ogate_ref[...] = run_chain(h, gw, gb, gate_acts).astype(ogate_ref.dtype)
    ovec_ref[...] = run_chain(h, ow, ob, out_acts).astype(ovec_ref.dtype)


def attention_mlps_forward(x, params, *, activation="relu",
                           edge_final="relu", gate_final="sigmoid",
                           out_final=None, tm=128):
    """Fused Pallas equivalent of:
         out_h = edge_nn(x); gate = gate_nn(out_h); vec = out_nn(out_h)
    Returns (out_h, gate, vec) with the original (unpadded) widths."""
    edge_p, gate_p, out_p = params["edge"], params["gate"], params["out"]
    B, d_in = x.shape
    assert d_in == edge_p["d_in"]
    out_dtype = x.dtype
    compute_dtype = edge_p["w"][0].dtype
    if x.dtype != compute_dtype:
        x = x.astype(compute_dtype)

    # Keep tm <= 128: every layer's f32 intermediate stays live across the
    # unrolled chain; larger tiles would spill vregs (v5e has 1 vst slot).
    mult = 16 if compute_dtype == jnp.bfloat16 else 8
    tm_eff = min(_round_up(min(tm, B), mult), 128)
    m_pad = _round_up(B, tm_eff)
    x_p = jnp.pad(x, ((0, m_pad - B), (0, 0))) if m_pad != B else x

    n_edge, n_gate, n_out = len(edge_p["w"]), len(gate_p["w"]), len(out_p["w"])
    edge_acts = tuple([activation] * (n_edge - 1) + [edge_final])
    gate_acts = tuple([activation] * (n_gate - 1) + [gate_final])
    out_acts = tuple([activation] * (n_out - 1) + [out_final])

    e_pad = edge_p["w"][-1].shape[1]
    g_pad = gate_p["w"][-1].shape[1]
    o_pad = out_p["w"][-1].shape[1]

    in_arrays = ([x_p] + edge_p["w"] + edge_p["b"]
                 + gate_p["w"] + gate_p["b"] + out_p["w"] + out_p["b"])
    in_specs = [pl.BlockSpec((tm_eff, d_in), lambda i: (i, 0))]
    for arr in in_arrays[1:]:
        # Grid-invariant full-extent blocks: DMA'd once, resident in VMEM.
        in_specs.append(pl.BlockSpec(arr.shape, lambda i: (0, 0)))

    kernel = functools.partial(
        _attention_chain_kernel, n_edge=n_edge, n_gate=n_gate, n_out=n_out,
        edge_acts=edge_acts, gate_acts=gate_acts, out_acts=out_acts)

    out_h, gate, vec = pl.pallas_call(
        kernel,
        out_shape=(jax.ShapeDtypeStruct((m_pad, e_pad), out_dtype),
                   jax.ShapeDtypeStruct((m_pad, g_pad), out_dtype),
                   jax.ShapeDtypeStruct((m_pad, o_pad), out_dtype)),
        grid_spec=pltpu.PrefetchScalarGridSpec(
            num_scalar_prefetch=0,
            grid=(m_pad // tm_eff,),
            in_specs=in_specs,
            out_specs=[pl.BlockSpec((tm_eff, e_pad), lambda i: (i, 0)),
                       pl.BlockSpec((tm_eff, g_pad), lambda i: (i, 0)),
                       pl.BlockSpec((tm_eff, o_pad), lambda i: (i, 0))],
        ),
        compiler_params=pltpu.CompilerParams(
            dimension_semantics=("parallel",),
            # Resident-weight budget (~1 MiB here) plus pipelined x/out tiles
            # fits comfortably; 32 MiB stays within v7x's 64 MiB physical and
            # raises v5e's 16 MiB default scoped limit if ever needed.
            vmem_limit_bytes=32 * 1024 * 1024,
        ),
    )(*in_arrays)

    return (out_h[:B, :edge_p["d_out"][-1]],
            gate[:B, :gate_p["d_out"][-1]],
            vec[:B, :out_p["d_out"][-1]])


# ----------------------------------------------------------------------------
# Kernel 2: single Block (Linear + activation).
#   * single-K fast path: no accumulator scratch, full-extent K blocks.
#   * multi-K path: (N, M, K) grid with f32 VMEM accumulator.
# ----------------------------------------------------------------------------
def _linear_fast_kernel(x_ref, w_ref, b_ref, o_ref, *, activation):
    out = jnp.dot(x_ref[...], w_ref[...], preferred_element_type=jnp.float32)
    out = _apply_activation(out + b_ref[...], activation)
    o_ref[...] = out.astype(o_ref.dtype)


def _linear_acc_kernel(x_ref, w_ref, b_ref, o_ref, acc_ref, *, activation):
    k = pl.program_id(2)

    @pl.when(k == 0)
    def _():
        acc_ref[...] = jnp.zeros_like(acc_ref)

    acc_ref[...] += jnp.dot(x_ref[...], w_ref[...],
                            preferred_element_type=jnp.float32)

    @pl.when(k == pl.num_programs(2) - 1)
    def _():
        out = _apply_activation(acc_ref[...] + b_ref[...], activation)
        o_ref[...] = out.astype(o_ref.dtype)


def block_forward(x, params, activation="relu", *, tm=256, tn=256, tk=512):
    """Pallas equivalent of Block.forward (batch_norm=False, dropout=0).
    `params` comes from prepare_linear_params (weights padded/cast once)."""
    w_p, b_p, d_out = params["w"], params["b"], params["d_out"]
    d_in, n_pad = w_p.shape
    B = x.shape[0]
    assert x.shape[1] == d_in
    out_dtype = x.dtype
    compute_dtype = w_p.dtype
    if x.dtype != compute_dtype:
        x = x.astype(compute_dtype)

    mult = 16 if compute_dtype == jnp.bfloat16 else 8   # bf16 packs 2 rows/sublane
    if B <= 512:
        tm_eff = _round_up(B, mult)                      # single M tile
    else:
        tm_eff = _round_up(min(tm, B), mult)
    m_pad = _round_up(B, tm_eff)
    tn_eff = _pick_tile(n_pad, max(128, (tn // 128) * 128), 128)
    tk_cap = max(128, (tk // 128) * 128)

    x_rows = jnp.pad(x, ((0, m_pad - B), (0, 0))) if m_pad != B else x

    if d_in <= tk_cap:
        # -------- single-K-tile fast path: no scratch, no K padding --------
        kernel = functools.partial(_linear_fast_kernel, activation=activation)
        out = pl.pallas_call(
            kernel,
            out_shape=jax.ShapeDtypeStruct((m_pad, n_pad), out_dtype),
            grid_spec=pltpu.PrefetchScalarGridSpec(
                num_scalar_prefetch=0,
                grid=(n_pad // tn_eff, m_pad // tm_eff),   # M innermost ->
                in_specs=[                                  # weight stays resident
                    pl.BlockSpec((tm_eff, d_in), lambda j, i: (i, 0)),
                    pl.BlockSpec((d_in, tn_eff), lambda j, i: (0, j)),
                    pl.BlockSpec((1, tn_eff), lambda j, i: (0, j)),
                ],
                out_specs=pl.BlockSpec((tm_eff, tn_eff), lambda j, i: (i, j)),
            ),
            compiler_params=pltpu.CompilerParams(
                dimension_semantics=("parallel", "parallel")),
        )(x_rows, w_p, b_p)
    else:
        # -------- multi-K accumulator path (large D_in) --------
        k_pad = _round_up(d_in, 128)
        tk_eff = _pick_tile(k_pad, tk_cap, 128)
        # Zero-padding the K axis of BOTH operands is required for correctness
        # (Pallas does not guarantee zeros in out-of-bounds block regions).
        x_kp = jnp.pad(x_rows, ((0, 0), (0, k_pad - d_in)))
        w_kp = jnp.pad(w_p, ((0, k_pad - d_in), (0, 0)))
        kernel = functools.partial(_linear_acc_kernel, activation=activation)
        out = pl.pallas_call(
            kernel,
            out_shape=jax.ShapeDtypeStruct((m_pad, n_pad), out_dtype),
            grid_spec=pltpu.PrefetchScalarGridSpec(
                num_scalar_prefetch=0,
                grid=(n_pad // tn_eff, m_pad // tm_eff, k_pad // tk_eff),
                in_specs=[
                    pl.BlockSpec((tm_eff, tk_eff), lambda j, i, k: (i, k)),
                    pl.BlockSpec((tk_eff, tn_eff), lambda j, i, k: (k, j)),
                    pl.BlockSpec((1, tn_eff), lambda j, i, k: (0, j)),
                ],
                out_specs=pl.BlockSpec((tm_eff, tn_eff),
                                       lambda j, i, k: (i, j)),
                scratch_shapes=[pltpu.VMEM((tm_eff, tn_eff), jnp.float32)],
            ),
            compiler_params=pltpu.CompilerParams(
                dimension_semantics=("parallel", "parallel", "arbitrary")),
        )(x_kp, w_kp, b_p)
    return out[:B, :d_out]


# ----------------------------------------------------------------------------
# Pure-JAX references + parameter init
# ----------------------------------------------------------------------------
def _init_linear(key, d_in, d_out):
    kw, kb = jax.random.split(key)
    bound = 1.0 / (d_in ** 0.5)
    w = jax.random.uniform(kw, (d_in, d_out), minval=-bound, maxval=bound,
                           dtype=jnp.float32)
    b = jax.random.uniform(kb, (d_out,), minval=-bound, maxval=bound,
                           dtype=jnp.float32)
    return w, b


def _init_mlp(key, dims):
    ws, bs = [], []
    for l in range(len(dims) - 1):
        key, sub = jax.random.split(key)
        w, b = _init_linear(sub, dims[l], dims[l + 1])
        ws.append(w)
        bs.append(b)
    return ws, bs


def _ref_mlp(x, ws, bs, activation, final_activation):
    acts = [activation] * (len(ws) - 1) + [final_activation]
    h = x
    for w, b, a in zip(ws, bs, acts):
        h = _apply_activation(h @ w + b[None, :], a)
    return h


if __name__ == "__main__":
    key = jax.random.PRNGKey(0)

    # Shapes consistent with EquivariantAttention(hidden_dim=32, edge_dim=16,
    # num_output_vectors=2): the dense MLPs operate on per-(masked)-edge rows.
    hidden_dim = 32
    edge_dim = 16
    num_output_vectors = 2
    n_edges = 24          # masked edges feeding edge_nn / gate_nn / out_nn
    n_rows_big = 200      # larger standalone Block test (single-K fast path)

    keys = jax.random.split(key, 8)

    edge_in_dim = 4 * hidden_dim + edge_dim                        # 144
    edge_dims = [edge_in_dim, hidden_dim, hidden_dim, hidden_dim]  # 3 layers
    gate_dims = [hidden_dim] * 5 + [num_output_vectors]            # 5 layers
    out_dims = [hidden_dim] * 5 + [num_output_vectors]             # 5 layers

    edge_w, edge_b = _init_mlp(keys[0], edge_dims)
    gate_w, gate_b = _init_mlp(keys[1], gate_dims)
    out_w, out_b = _init_mlp(keys[2], out_dims)

    edge_feats = jax.random.normal(keys[3], (n_edges, edge_in_dim),
                                   dtype=jnp.float32)

    # --- one-time parameter preprocessing (hoisted out of the forward) ---
    att_params = prepare_attention_mlp_params(edge_w, edge_b, gate_w, gate_b,
                                              out_w, out_b)

    # --- fused edge_nn -> {gate_nn, out_nn} chain: ONE pallas_call ---
    out_h, gate, vec = attention_mlps_forward(edge_feats, att_params)
    out_h, gate, vec = jax.block_until_ready((out_h, gate, vec))

    ref_out_h = _ref_mlp(edge_feats, edge_w, edge_b, "relu", "relu")
    ref_gate = _ref_mlp(ref_out_h, gate_w, gate_b, "relu", "sigmoid")
    ref_vec = _ref_mlp(ref_out_h, out_w, out_b, "relu", None)

    assert out_h.shape == (n_edges, hidden_dim)
    assert gate.shape == (n_edges, num_output_vectors)
    assert vec.shape == (n_edges, num_output_vectors)
    assert jnp.allclose(out_h, ref_out_h, atol=2e-4, rtol=2e-4)
    assert jnp.allclose(gate, ref_gate, atol=2e-4, rtol=2e-4)
    assert jnp.allclose(vec, ref_vec, atol=2e-4, rtol=2e-4)

    # --- standalone Block, single-K fast path (B=200, K=144 unpadded) ---
    xb = jax.random.normal(keys[4], (n_rows_big, edge_in_dim),
                           dtype=jnp.float32)
    wb, bb = _init_linear(keys[5], edge_in_dim, hidden_dim)
    blk = prepare_linear_params(wb, bb)

    yb = block_forward(xb, blk, activation="relu")
    yb = jax.block_until_ready(yb)
    ref_yb = _apply_activation(xb @ wb + bb[None, :], "relu")
    assert yb.shape == (n_rows_big, hidden_dim)
    assert jnp.allclose(yb, ref_yb, atol=1e-4, rtol=1e-4)

    # bf16 MXU-operand path (f32 accumulate); rows rounded to 16 for packing.
    blk16 = prepare_linear_params(wb, bb, compute_dtype=jnp.bfloat16)
    yb16 = block_forward(xb, blk16, activation="relu")
    yb16 = jax.block_until_ready(yb16)
    assert jnp.allclose(yb16, ref_yb, atol=6e-2, rtol=6e-2)

    # --- standalone Block, multi-K accumulator path (forced with tk=128) ---
    xk = jax.random.normal(keys[6], (64, 400), dtype=jnp.float32)
    wk, bk = _init_linear(keys[7], 400, 96)
    blk_k = prepare_linear_params(wk, bk)
    yk = block_forward(xk, blk_k, activation="elu", tk=128)
    yk = jax.block_until_ready(yk)
    ref_yk = _apply_activation(xk @ wk + bk[None, :], "elu")
    assert yk.shape == (64, 96)
    assert jnp.allclose(yk, ref_yk, atol=1e-4, rtol=1e-4)

    print("KERNEL_OK")
</pallas_src>

<mosaic_0001>
module attributes {stable_mosaic.version = 11 : i64} {
  func.func @_attention_chain_kernel(%arg0: i32, %arg1: memref<24x144xf32, #tpu.memory_space<vmem>>, %arg2: memref<144x128xf32, #tpu.memory_space<vmem>>, %arg3: memref<128x128xf32, #tpu.memory_space<vmem>>, %arg4: memref<128x128xf32, #tpu.memory_space<vmem>>, %arg5: memref<1x128xf32, #tpu.memory_space<vmem>>, %arg6: memref<1x128xf32, #tpu.memory_space<vmem>>, %arg7: memref<1x128xf32, #tpu.memory_space<vmem>>, %arg8: memref<128x128xf32, #tpu.memory_space<vmem>>, %arg9: memref<128x128xf32, #tpu.memory_space<vmem>>, %arg10: memref<128x128xf32, #tpu.memory_space<vmem>>, %arg11: memref<128x128xf32, #tpu.memory_space<vmem>>, %arg12: memref<128x128xf32, #tpu.memory_space<vmem>>, %arg13: memref<1x128xf32, #tpu.memory_space<vmem>>, %arg14: memref<1x128xf32, #tpu.memory_space<vmem>>, %arg15: memref<1x128xf32, #tpu.memory_space<vmem>>, %arg16: memref<1x128xf32, #tpu.memory_space<vmem>>, %arg17: memref<1x128xf32, #tpu.memory_space<vmem>>, %arg18: memref<128x128xf32, #tpu.memory_space<vmem>>, %arg19: memref<128x128xf32, #tpu.memory_space<vmem>>, %arg20: memref<128x128xf32, #tpu.memory_space<vmem>>, %arg21: memref<128x128xf32, #tpu.memory_space<vmem>>, %arg22: memref<128x128xf32, #tpu.memory_space<vmem>>, %arg23: memref<1x128xf32, #tpu.memory_space<vmem>>, %arg24: memref<1x128xf32, #tpu.memory_space<vmem>>, %arg25: memref<1x128xf32, #tpu.memory_space<vmem>>, %arg26: memref<1x128xf32, #tpu.memory_space<vmem>>, %arg27: memref<1x128xf32, #tpu.memory_space<vmem>>, %arg28: memref<24x128xf32, #tpu.memory_space<vmem>>, %arg29: memref<24x128xf32, #tpu.memory_space<vmem>>, %arg30: memref<24x128xf32, #tpu.memory_space<vmem>>) attributes {dimension_semantics = [#tpu.dimension_semantics<parallel>], iteration_bounds = array<i64: 1>, scalar_prefetch = 0 : i64, scratch_operands = 0 : i64, tpu.core_type = #tpu.core_type<tc>, window_params = [{transform_indices = @transform_0, window_bounds = array<i64: 24, 144>}, {pipeline_mode = #tpu.pipeline_mode<synchronous>, transform_indices = @transform_1, window_bounds = array<i64: 144, 128>}, {pipeline_mode = #tpu.pipeline_mode<synchronous>, transform_indices = @transform_2, window_bounds = array<i64: 128, 128>}, {pipeline_mode = #tpu.pipeline_mode<synchronous>, transform_indices = @transform_3, window_bounds = array<i64: 128, 128>}, {pipeline_mode = #tpu.pipeline_mode<synchronous>, transform_indices = @transform_4, window_bounds = array<i64: 1, 128>}, {pipeline_mode = #tpu.pipeline_mode<synchronous>, transform_indices = @transform_5, window_bounds = array<i64: 1, 128>}, {pipeline_mode = #tpu.pipeline_mode<synchronous>, transform_indices = @transform_6, window_bounds = array<i64: 1, 128>}, {pipeline_mode = #tpu.pipeline_mode<synchronous>, transform_indices = @transform_7, window_bounds = array<i64: 128, 128>}, {pipeline_mode = #tpu.pipeline_mode<synchronous>, transform_indices = @transform_8, window_bounds = array<i64: 128, 128>}, {pipeline_mode = #tpu.pipeline_mode<synchronous>, transform_indices = @transform_9, window_bounds = array<i64: 128, 128>}, {pipeline_mode = #tpu.pipeline_mode<synchronous>, transform_indices = @transform_10, window_bounds = array<i64: 128, 128>}, {pipeline_mode = #tpu.pipeline_mode<synchronous>, transform_indices = @transform_11, window_bounds = array<i64: 128, 128>}, {pipeline_mode = #tpu.pipeline_mode<synchronous>, transform_indices = @transform_12, window_bounds = array<i64: 1, 128>}, {pipeline_mode = #tpu.pipeline_mode<synchronous>, transform_indices = @transform_13, window_bounds = array<i64: 1, 128>}, {pipeline_mode = #tpu.pipeline_mode<synchronous>, transform_indices = @transform_14, window_bounds = array<i64: 1, 128>}, {pipeline_mode = #tpu.pipeline_mode<synchronous>, transform_indices = @transform_15, window_bounds = array<i64: 1, 128>}, {pipeline_mode = #tpu.pipeline_mode<synchronous>, transform_indices = @transform_16, window_bounds = array<i64: 1, 128>}, {pipeline_mode = #tpu.pipeline_mode<synchronous>, transform_indices = @transform_17, window_bounds = array<i64: 128, 128>}, {pipeline_mode = #tpu.pipeline_mode<synchronous>, transform_indices = @transform_18, window_bounds = array<i64: 128, 128>}, {pipeline_mode = #tpu.pipeline_mode<synchronous>, transform_indices = @transform_19, window_bounds = array<i64: 128, 128>}, {pipeline_mode = #tpu.pipeline_mode<synchronous>, transform_indices = @transform_20, window_bounds = array<i64: 128, 128>}, {pipeline_mode = #tpu.pipeline_mode<synchronous>, transform_indices = @transform_21, window_bounds = array<i64: 128, 128>}, {pipeline_mode = #tpu.pipeline_mode<synchronous>, transform_indices = @transform_22, window_bounds = array<i64: 1, 128>}, {pipeline_mode = #tpu.pipeline_mode<synchronous>, transform_indices = @transform_23, window_bounds = array<i64: 1, 128>}, {pipeline_mode = #tpu.pipeline_mode<synchronous>, transform_indices = @transform_24, window_bounds = array<i64: 1, 128>}, {pipeline_mode = #tpu.pipeline_mode<synchronous>, transform_indices = @transform_25, window_bounds = array<i64: 1, 128>}, {pipeline_mode = #tpu.pipeline_mode<synchronous>, transform_indices = @transform_26, window_bounds = array<i64: 1, 128>}, {transform_indices = @transform_27, window_bounds = array<i64: 24, 128>}, {transform_indices = @transform_28, window_bounds = array<i64: 24, 128>}, {transform_indices = @transform_29, window_bounds = array<i64: 24, 128>}]} {
    %c0 = arith.constant 0 : index
    %c0_0 = arith.constant 0 : index
    %0 = vector.load %arg1[%c0, %c0_0] : memref<24x144xf32, #tpu.memory_space<vmem>>, vector<24x144xf32>
    %c0_1 = arith.constant 0 : index
    %c0_2 = arith.constant 0 : index
    %1 = vector.load %arg2[%c0_1, %c0_2] : memref<144x128xf32, #tpu.memory_space<vmem>>, vector<144x128xf32>
    %cst = arith.constant dense<0.000000e+00> : vector<24x128xf32>
    %2 = tpu.matmul %0, %1, %cst {dimension_numbers = #tpu.dot_dimension_numbers<[1], [0], [0], [1], [0, 0, 1, 1], [], []>} : vector<24x144xf32>, vector<144x128xf32>, vector<24x128xf32> -> vector<24x128xf32>
    %c0_3 = arith.constant 0 : index
    %c0_4 = arith.constant 0 : index
    %3 = vector.load %arg5[%c0_3, %c0_4] : memref<1x128xf32, #tpu.memory_space<vmem>>, vector<1x128xf32>
    %4 = vector.broadcast %3 : vector<1x128xf32> to vector<24x128xf32>
    %5 = arith.addf %2, %4 : vector<24x128xf32>
    %cst_5 = arith.constant 0.000000e+00 : f32
    %6 = vector.broadcast %cst_5 : f32 to vector<24x128xf32>
    %7 = arith.maximumf %5, %6 : vector<24x128xf32>
    %c0_6 = arith.constant 0 : index
    %c0_7 = arith.constant 0 : index
    %8 = vector.load %arg3[%c0_6, %c0_7] : memref<128x128xf32, #tpu.memory_space<vmem>>, vector<128x128xf32>
    %cst_8 = arith.constant dense<0.000000e+00> : vector<24x128xf32>
    %9 = tpu.matmul %7, %8, %cst_8 {dimension_numbers = #tpu.dot_dimension_numbers<[1], [0], [0], [1], [0, 0, 1, 1], [], []>} : vector<24x128xf32>, vector<128x128xf32>, vector<24x128xf32> -> vector<24x128xf32>
    %c0_9 = arith.constant 0 : index
    %c0_10 = arith.constant 0 : index
    %10 = vector.load %arg6[%c0_9, %c0_10] : memref<1x128xf32, #tpu.memory_space<vmem>>, vector<1x128xf32>
    %11 = vector.broadcast %10 : vector<1x128xf32> to vector<24x128xf32>
    %12 = arith.addf %9, %11 : vector<24x128xf32>
    %cst_11 = arith.constant 0.000000e+00 : f32
    %13 = vector.broadcast %cst_11 : f32 to vector<24x128xf32>
    %14 = arith.maximumf %12, %13 : vector<24x128xf32>
    %c0_12 = arith.constant 0 : index
    %c0_13 = arith.constant 0 : index
    %15 = vector.load %arg4[%c0_12, %c0_13] : memref<128x128xf32, #tpu.memory_space<vmem>>, vector<128x128xf32>
    %cst_14 = arith.constant dense<0.000000e+00> : vector<24x128xf32>
    %16 = tpu.matmul %14, %15, %cst_14 {dimension_numbers = #tpu.dot_dimension_numbers<[1], [0], [0], [1], [0, 0, 1, 1], [], []>} : vector<24x128xf32>, vector<128x128xf32>, vector<24x128xf32> -> vector<24x128xf32>
    %c0_15 = arith.constant 0 : index
    %c0_16 = arith.constant 0 : index
    %17 = vector.load %arg7[%c0_15, %c0_16] : memref<1x128xf32, #tpu.memory_space<vmem>>, vector<1x128xf32>
    %18 = vector.broadcast %17 : vector<1x128xf32> to vector<24x128xf32>
    %19 = arith.addf %16, %18 : vector<24x128xf32>
    %cst_17 = arith.constant 0.000000e+00 : f32
    %20 = vector.broadcast %cst_17 : f32 to vector<24x128xf32>
    %21 = arith.maximumf %19, %20 : vector<24x128xf32>
    %c0_18 = arith.constant 0 : index
    %c0_19 = arith.constant 0 : index
    %22 = vector.load %arg28[%c0_18, %c0_19] : memref<24x128xf32, #tpu.memory_space<vmem>>, vector<24x128xf32>
    tpu.vector_store %arg28[%c0_18, %c0_19], %21 {strides = array<i32>} : memref<24x128xf32, #tpu.memory_space<vmem>>, vector<24x128xf32>,
    %c0_20 = arith.constant 0 : index
    %c0_21 = arith.constant 0 : index
    %23 = vector.load %arg8[%c0_20, %c0_21] : memref<128x128xf32, #tpu.memory_space<vmem>>, vector<128x128xf32>
    %cst_22 = arith.constant dense<0.000000e+00> : vector<24x128xf32>
    %24 = tpu.matmul %21, %23, %cst_22 {dimension_numbers = #tpu.dot_dimension_numbers<[1], [0], [0], [1], [0, 0, 1, 1], [], []>} : vector<24x128xf32>, vector<128x128xf32>, vector<24x128xf32> -> vector<24x128xf32>
    %c0_23 = arith.constant 0 : index
    %c0_24 = arith.constant 0 : index
    %25 = vector.load %arg13[%c0_23, %c0_24] : memref<1x128xf32, #tpu.memory_space<vmem>>, vector<1x128xf32>
    %26 = vector.broadcast %25 : vector<1x128xf32> to vector<24x128xf32>
    %27 = arith.addf %24, %26 : vector<24x128xf32>
    %cst_25 = arith.constant 0.000000e+00 : f32
    %28 = vector.broadcast %cst_25 : f32 to vector<24x128xf32>
    %29 = arith.maximumf %27, %28 : vector<24x128xf32>
    %c0_26 = arith.constant 0 : index
    %c0_27 = arith.constant 0 : index
    %30 = vector.load %arg9[%c0_26, %c0_27] : memref<128x128xf32, #tpu.memory_space<vmem>>, vector<128x128xf32>
    %cst_28 = arith.constant dense<0.000000e+00> : vector<24x128xf32>
    %31 = tpu.matmul %29, %30, %cst_28 {dimension_numbers = #tpu.dot_dimension_numbers<[1], [0], [0], [1], [0, 0, 1, 1], [], []>} : vector<24x128xf32>, vector<128x128xf32>, vector<24x128xf32> -> vector<24x128xf32>
    %c0_29 = arith.constant 0 : index
    %c0_30 = arith.constant 0 : index
    %32 = vector.load %arg14[%c0_29, %c0_30] : memref<1x128xf32, #tpu.memory_space<vmem>>, vector<1x128xf32>
    %33 = vector.broadcast %32 : vector<1x128xf32> to vector<24x128xf32>
    %34 = arith.addf %31, %33 : vector<24x128xf32>
    %cst_31 = arith.constant 0.000000e+00 : f32
    %35 = vector.broadcast %cst_31 : f32 to vector<24x128xf32>
    %36 = arith.maximumf %34, %35 : vector<24x128xf32>
    %c0_32 = arith.constant 0 : index
    %c0_33 = arith.constant 0 : index
    %37 = vector.load %arg10[%c0_32, %c0_33] : memref<128x128xf32, #tpu.memory_space<vmem>>, vector<128x128xf32>
    %cst_34 = arith.constant dense<0.000000e+00> : vector<24x128xf32>
    %38 = tpu.matmul %36, %37, %cst_34 {dimension_numbers = #tpu.dot_dimension_numbers<[1], [0], [0], [1], [0, 0, 1, 1], [], []>} : vector<24x128xf32>, vector<128x128xf32>, vector<24x128xf32> -> vector<24x128xf32>
    %c0_35 = arith.constant 0 : index
    %c0_36 = arith.constant 0 : index
    %39 = vector.load %arg15[%c0_35, %c0_36] : memref<1x128xf32, #tpu.memory_space<vmem>>, vector<1x128xf32>
    %40 = vector.broadcast %39 : vector<1x128xf32> to vector<24x128xf32>
    %41 = arith.addf %38, %40 : vector<24x128xf32>
    %cst_37 = arith.constant 0.000000e+00 : f32
    %42 = vector.broadcast %cst_37 : f32 to vector<24x128xf32>
    %43 = arith.maximumf %41, %42 : vector<24x128xf32>
    %c0_38 = arith.constant 0 : index
    %c0_39 = arith.constant 0 : index
    %44 = vector.load %arg11[%c0_38, %c0_39] : memref<128x128xf32, #tpu.memory_space<vmem>>, vector<128x128xf32>
    %cst_40 = arith.constant dense<0.000000e+00> : vector<24x128xf32>
    %45 = tpu.matmul %43, %44, %cst_40 {dimension_numbers = #tpu.dot_dimension_numbers<[1], [0], [0], [1], [0, 0, 1, 1], [], []>} : vector<24x128xf32>, vector<128x128xf32>, vector<24x128xf32> -> vector<24x128xf32>
    %c0_41 = arith.constant 0 : index
    %c0_42 = arith.constant 0 : index
    %46 = vector.load %arg16[%c0_41, %c0_42] : memref<1x128xf32, #tpu.memory_space<vmem>>, vector<1x128xf32>
    %47 = vector.broadcast %46 : vector<1x128xf32> to vector<24x128xf32>
    %48 = arith.addf %45, %47 : vector<24x128xf32>
    %cst_43 = arith.constant 0.000000e+00 : f32
    %49 = vector.broadcast %cst_43 : f32 to vector<24x128xf32>
    %50 = arith.maximumf %48, %49 : vector<24x128xf32>
    %c0_44 = arith.constant 0 : index
    %c0_45 = arith.constant 0 : index
    %51 = vector.load %arg12[%c0_44, %c0_45] : memref<128x128xf32, #tpu.memory_space<vmem>>, vector<128x128xf32>
    %cst_46 = arith.constant dense<0.000000e+00> : vector<24x128xf32>
    %52 = tpu.matmul %50, %51, %cst_46 {dimension_numbers = #tpu.dot_dimension_numbers<[1], [0], [0], [1], [0, 0, 1, 1], [], []>} : vector<24x128xf32>, vector<128x128xf32>, vector<24x128xf32> -> vector<24x128xf32>
    %c0_47 = arith.constant 0 : index
    %c0_48 = arith.constant 0 : index
    %53 = vector.load %arg17[%c0_47, %c0_48] : memref<1x128xf32, #tpu.memory_space<vmem>>, vector<1x128xf32>
    %54 = vector.broadcast %53 : vector<1x128xf32> to vector<24x128xf32>
    %55 = arith.addf %52, %54 : vector<24x128xf32>
    %56 = arith.negf %55 : vector<24x128xf32>
    %57 = math.exp %56 : vector<24x128xf32>
    %cst_49 = arith.constant 1.000000e+00 : f32
    %58 = vector.broadcast %cst_49 : f32 to vector<24x128xf32>
    %59 = arith.addf %58, %57 : vector<24x128xf32>
    %60 = arith.divf %58, %59 : vector<24x128xf32>
    %c0_50 = arith.constant 0 : index
    %c0_51 = arith.constant 0 : index
    %61 = vector.load %arg29[%c0_50, %c0_51] : memref<24x128xf32, #tpu.memory_space<vmem>>, vector<24x128xf32>
    tpu.vector_store %arg29[%c0_50, %c0_51], %60 {strides = array<i32>} : memref<24x128xf32, #tpu.memory_space<vmem>>, vector<24x128xf32>,
    %c0_52 = arith.constant 0 : index
    %c0_53 = arith.constant 0 : index
    %62 = vector.load %arg18[%c0_52, %c0_53] : memref<128x128xf32, #tpu.memory_space<vmem>>, vector<128x128xf32>
    %cst_54 = arith.constant dense<0.000000e+00> : vector<24x128xf32>
    %63 = tpu.matmul %21, %62, %cst_54 {dimension_numbers = #tpu.dot_dimension_numbers<[1], [0], [0], [1], [0, 0, 1, 1], [], []>} : vector<24x128xf32>, vector<128x128xf32>, vector<24x128xf32> -> vector<24x128xf32>
    %c0_55 = arith.constant 0 : index
    %c0_56 = arith.constant 0 : index
    %64 = vector.load %arg23[%c0_55, %c0_56] : memref<1x128xf32, #tpu.memory_space<vmem>>, vector<1x128xf32>
    %65 = vector.broadcast %64 : vector<1x128xf32> to vector<24x128xf32>
    %66 = arith.addf %63, %65 : vector<24x128xf32>
    %cst_57 = arith.constant 0.000000e+00 : f32
    %67 = vector.broadcast %cst_57 : f32 to vector<24x128xf32>
    %68 = arith.maximumf %66, %67 : vector<24x128xf32>
    %c0_58 = arith.constant 0 : index
    %c0_59 = arith.constant 0 : index
    %69 = vector.load %arg19[%c0_58, %c0_59] : memref<128x128xf32, #tpu.memory_space<vmem>>, vector<128x128xf32>
    %cst_60 = arith.constant dense<0.000000e+00> : vector<24x128xf32>
    %70 = tpu.matmul %68, %69, %cst_60 {dimension_numbers = #tpu.dot_dimension_numbers<[1], [0], [0], [1], [0, 0, 1, 1], [], []>} : vector<24x128xf32>, vector<128x128xf32>, vector<24x128xf32> -> vector<24x128xf32>
    %c0_61 = arith.constant 0 : index
    %c0_62 = arith.constant 0 : index
    %71 = vector.load %arg24[%c0_61, %c0_62] : memref<1x128xf32, #tpu.memory_space<vmem>>, vector<1x128xf32>
    %72 = vector.broadcast %71 : vector<1x128xf32> to vector<24x128xf32>
    %73 = arith.addf %70, %72 : vector<24x128xf32>
    %cst_63 = arith.constant 0.000000e+00 : f32
    %74 = vector.broadcast %cst_63 : f32 to vector<24x128xf32>
    %75 = arith.maximumf %73, %74 : vector<24x128xf32>
    %c0_64 = arith.constant 0 : index
    %c0_65 = arith.constant 0 : index
    %76 = vector.load %arg20[%c0_64, %c0_65] : memref<128x128xf32, #tpu.memory_space<vmem>>, vector<128x128xf32>
    %cst_66 = arith.constant dense<0.000000e+00> : vector<24x128xf32>
    %77 = tpu.matmul %75, %76, %cst_66 {dimension_numbers = #tpu.dot_dimension_numbers<[1], [0], [0], [1], [0, 0, 1, 1], [], []>} : vector<24x128xf32>, vector<128x128xf32>, vector<24x128xf32> -> vector<24x128xf32>
    %c0_67 = arith.constant 0 : index
    %c0_68 = arith.constant 0 : index
    %78 = vector.load %arg25[%c0_67, %c0_68] : memref<1x128xf32, #tpu.memory_space<vmem>>, vector<1x128xf32>
    %79 = vector.broadcast %78 : vector<1x128xf32> to vector<24x128xf32>
    %80 = arith.addf %77, %79 : vector<24x128xf32>
    %cst_69 = arith.constant 0.000000e+00 : f32
    %81 = vector.broadcast %cst_69 : f32 to vector<24x128xf32>
    %82 = arith.maximumf %80, %81 : vector<24x128xf32>
    %c0_70 = arith.constant 0 : index
    %c0_71 = arith.constant 0 : index
    %83 = vector.load %arg21[%c0_70, %c0_71] : memref<128x128xf32, #tpu.memory_space<vmem>>, vector<128x128xf32>
    %cst_72 = arith.constant dense<0.000000e+00> : vector<24x128xf32>
    %84 = tpu.matmul %82, %83, %cst_72 {dimension_numbers = #tpu.dot_dimension_numbers<[1], [0], [0], [1], [0, 0, 1, 1], [], []>} : vector<24x128xf32>, vector<128x128xf32>, vector<24x128xf32> -> vector<24x128xf32>
    %c0_73 = arith.constant 0 : index
    %c0_74 = arith.constant 0 : index
    %85 = vector.load %arg26[%c0_73, %c0_74] : memref<1x128xf32, #tpu.memory_space<vmem>>, vector<1x128xf32>
    %86 = vector.broadcast %85 : vector<1x128xf32> to vector<24x128xf32>
    %87 = arith.addf %84, %86 : vector<24x128xf32>
    %cst_75 = arith.constant 0.000000e+00 : f32
    %88 = vector.broadcast %cst_75 : f32 to vector<24x128xf32>
    %89 = arith.maximumf %87, %88 : vector<24x128xf32>
    %c0_76 = arith.constant 0 : index
    %c0_77 = arith.constant 0 : index
    %90 = vector.load %arg22[%c0_76, %c0_77] : memref<128x128xf32, #tpu.memory_space<vmem>>, vector<128x128xf32>
    %cst_78 = arith.constant dense<0.000000e+00> : vector<24x128xf32>
    %91 = tpu.matmul %89, %90, %cst_78 {dimension_numbers = #tpu.dot_dimension_numbers<[1], [0], [0], [1], [0, 0, 1, 1], [], []>} : vector<24x128xf32>, vector<128x128xf32>, vector<24x128xf32> -> vector<24x128xf32>
    %c0_79 = arith.constant 0 : index
    %c0_80 = arith.constant 0 : index
    %92 = vector.load %arg27[%c0_79, %c0_80] : memref<1x128xf32, #tpu.memory_space<vmem>>, vector<1x128xf32>
    %93 = vector.broadcast %92 : vector<1x128xf32> to vector<24x128xf32>
    %94 = arith.addf %91, %93 : vector<24x128xf32>
    %c0_81 = arith.constant 0 : index
    %c0_82 = arith.constant 0 : index
    %95 = vector.load %arg30[%c0_81, %c0_82] : memref<24x128xf32, #tpu.memory_space<vmem>>, vector<24x128xf32>
    tpu.vector_store %arg30[%c0_81, %c0_82], %94 {strides = array<i32>} : memref<24x128xf32, #tpu.memory_space<vmem>>, vector<24x128xf32>,
    return
  }
  func.func @transform_0(%arg0: i32) -> (i32, i32) {
    %c0_i32 = arith.constant 0 : i32
    %c0_i32_0 = arith.constant 0 : i32
    return %arg0, %c0_i32 : i32, i32
  }
  func.func @transform_1(%arg0: i32) -> (i32, i32) {
    %c0_i32 = arith.constant 0 : i32
    %c0_i32_0 = arith.constant 0 : i32
    %c0_i32_1 = arith.constant 0 : i32
    return %c0_i32, %c0_i32_0 : i32, i32
  }
  func.func @transform_2(%arg0: i32) -> (i32, i32) {
    %c0_i32 = arith.constant 0 : i32
    %c0_i32_0 = arith.constant 0 : i32
    %c0_i32_1 = arith.constant 0 : i32
    return %c0_i32, %c0_i32_0 : i32, i32
  }
  func.func @transform_3(%arg0: i32) -> (i32, i32) {
    %c0_i32 = arith.constant 0 : i32
    %c0_i32_0 = arith.constant 0 : i32
    %c0_i32_1 = arith.constant 0 : i32
    return %c0_i32, %c0_i32_0 : i32, i32
  }
  func.func @transform_4(%arg0: i32) -> (i32, i32) {
    %c0_i32 = arith.constant 0 : i32
    %c0_i32_0 = arith.constant 0 : i32
    %c0_i32_1 = arith.constant 0 : i32
    return %c0_i32, %c0_i32_0 : i32, i32
  }
  func.func @transform_5(%arg0: i32) -> (i32, i32) {
    %c0_i32 = arith.constant 0 : i32
    %c0_i32_0 = arith.constant 0 : i32
    %c0_i32_1 = arith.constant 0 : i32
    return %c0_i32, %c0_i32_0 : i32, i32
  }
  func.func @transform_6(%arg0: i32) -> (i32, i32) {
    %c0_i32 = arith.constant 0 : i32
    %c0_i32_0 = arith.constant 0 : i32
    %c0_i32_1 = arith.constant 0 : i32
    return %c0_i32, %c0_i32_0 : i32, i32
  }
  func.func @transform_7(%arg0: i32) -> (i32, i32) {
    %c0_i32 = arith.constant 0 : i32
    %c0_i32_0 = arith.constant 0 : i32
    %c0_i32_1 = arith.constant 0 : i32
    return %c0_i32, %c0_i32_0 : i32, i32
  }
  func.func @transform_8(%arg0: i32) -> (i32, i32) {
    %c0_i32 = arith.constant 0 : i32
    %c0_i32_0 = arith.constant 0 : i32
    %c0_i32_1 = arith.constant 0 : i32
    return %c0_i32, %c0_i32_0 : i32, i32
  }
  func.func @transform_9(%arg0: i32) -> (i32, i32) {
    %c0_i32 = arith.constant 0 : i32
    %c0_i32_0 = arith.constant 0 : i32
    %c0_i32_1 = arith.constant 0 : i32
    return %c0_i32, %c0_i32_0 : i32, i32
  }
  func.func @transform_10(%arg0: i32) -> (i32, i32) {
    %c0_i32 = arith.constant 0 : i32
    %c0_i32_0 = arith.constant 0 : i32
    %c0_i32_1 = arith.constant 0 : i32
    return %c0_i32, %c0_i32_0 : i32, i32
  }
  func.func @transform_11(%arg0: i32) -> (i32, i32) {
    %c0_i32 = arith.constant 0 : i32
    %c0_i32_0 = arith.constant 0 : i32
    %c0_i32_1 = arith.constant 0 : i32
    return %c0_i32, %c0_i32_0 : i32, i32
  }
  func.func @transform_12(%arg0: i32) -> (i32, i32) {
    %c0_i32 = arith.constant 0 : i32
    %c0_i32_0 = arith.constant 0 : i32
    %c0_i32_1 = arith.constant 0 : i32
    return %c0_i32, %c0_i32_0 : i32, i32
  }
  func.func @transform_13(%arg0: i32) -> (i32, i32) {
    %c0_i32 = arith.constant 0 : i32
    %c0_i32_0 = arith.constant 0 : i32
    %c0_i32_1 = arith.constant 0 : i32
    return %c0_i32, %c0_i32_0 : i32, i32
  }
  func.func @transform_14(%arg0: i32) -> (i32, i32) {
    %c0_i32 = arith.constant 0 : i32
    %c0_i32_0 = arith.constant 0 : i32
    %c0_i32_1 = arith.constant 0 : i32
    return %c0_i32, %c0_i32_0 : i32, i32
  }
  func.func @transform_15(%arg0: i32) -> (i32, i32) {
    %c0_i32 = arith.constant 0 : i32
    %c0_i32_0 = arith.constant 0 : i32
    %c0_i32_1 = arith.constant 0 : i32
    return %c0_i32, %c0_i32_0 : i32, i32
  }
  func.func @transform_16(%arg0: i32) -> (i32, i32) {
    %c0_i32 = arith.constant 0 : i32
    %c0_i32_0 = arith.constant 0 : i32
    %c0_i32_1 = arith.constant 0 : i32
    return %c0_i32, %c0_i32_0 : i32, i32
  }
  func.func @transform_17(%arg0: i32) -> (i32, i32) {
    %c0_i32 = arith.constant 0 : i32
    %c0_i32_0 = arith.constant 0 : i32
    %c0_i32_1 = arith.constant 0 : i32
    return %c0_i32, %c0_i32_0 : i32, i32
  }
  func.func @transform_18(%arg0: i32) -> (i32, i32) {
    %c0_i32 = arith.constant 0 : i32
    %c0_i32_0 = arith.constant 0 : i32
    %c0_i32_1 = arith.constant 0 : i32
    return %c0_i32, %c0_i32_0 : i32, i32
  }
  func.func @transform_19(%arg0: i32) -> (i32, i32) {
    %c0_i32 = arith.constant 0 : i32
    %c0_i32_0 = arith.constant 0 : i32
    %c0_i32_1 = arith.constant 0 : i32
    return %c0_i32, %c0_i32_0 : i32, i32
  }
  func.func @transform_20(%arg0: i32) -> (i32, i32) {
    %c0_i32 = arith.constant 0 : i32
    %c0_i32_0 = arith.constant 0 : i32
    %c0_i32_1 = arith.constant 0 : i32
    return %c0_i32, %c0_i32_0 : i32, i32
  }
  func.func @transform_21(%arg0: i32) -> (i32, i32) {
    %c0_i32 = arith.constant 0 : i32
    %c0_i32_0 = arith.constant 0 : i32
    %c0_i32_1 = arith.constant 0 : i32
    return %c0_i32, %c0_i32_0 : i32, i32
  }
  func.func @transform_22(%arg0: i32) -> (i32, i32) {
    %c0_i32 = arith.constant 0 : i32
    %c0_i32_0 = arith.constant 0 : i32
    %c0_i32_1 = arith.constant 0 : i32
    return %c0_i32, %c0_i32_0 : i32, i32
  }
  func.func @transform_23(%arg0: i32) -> (i32, i32) {
    %c0_i32 = arith.constant 0 : i32
    %c0_i32_0 = arith.constant 0 : i32
    %c0_i32_1 = arith.constant 0 : i32
    return %c0_i32, %c0_i32_0 : i32, i32
  }
  func.func @transform_24(%arg0: i32) -> (i32, i32) {
    %c0_i32 = arith.constant 0 : i32
    %c0_i32_0 = arith.constant 0 : i32
    %c0_i32_1 = arith.constant 0 : i32
    return %c0_i32, %c0_i32_0 : i32, i32
  }
  func.func @transform_25(%arg0: i32) -> (i32, i32) {
    %c0_i32 = arith.constant 0 : i32
    %c0_i32_0 = arith.constant 0 : i32
    %c0_i32_1 = arith.constant 0 : i32
    return %c0_i32, %c0_i32_0 : i32, i32
  }
  func.func @transform_26(%arg0: i32) -> (i32, i32) {
    %c0_i32 = arith.constant 0 : i32
    %c0_i32_0 = arith.constant 0 : i32
    %c0_i32_1 = arith.constant 0 : i32
    return %c0_i32, %c0_i32_0 : i32, i32
  }
  func.func @transform_27(%arg0: i32) -> (i32, i32) {
    %c0_i32 = arith.constant 0 : i32
    %c0_i32_0 = arith.constant 0 : i32
    return %arg0, %c0_i32 : i32, i32
  }
  func.func @transform_28(%arg0: i32) -> (i32, i32) {
    %c0_i32 = arith.constant 0 : i32
    %c0_i32_0 = arith.constant 0 : i32
    return %arg0, %c0_i32 : i32, i32
  }
  func.func @transform_29(%arg0: i32) -> (i32, i32) {
    %c0_i32 = arith.constant 0 : i32
    %c0_i32_0 = arith.constant 0 : i32
    return %arg0, %c0_i32 : i32, i32
  }
}

</mosaic_0001>

<llo_original>
// kernel: tpu_custom_call.1
$region0: #{tpu_custom_call.1}
  #allocation0 [shape = 'u32[]', space=smem, size = 0x4, offset = 0x4, fixed_abs, tag = 'smem constant byte address 0x4 - core index']
  #allocation1 [shape = 'u32[144,128]{1,0:T(1,128)}', space=vmem, size = 0x12000, scoped, tag = 'internal scratch']
  %s0 = inlined_call_operand.smem [shape: u32[30], index: -1, kind: input, shape index: {}]
  %s1 = sld [smem:[%s0]]
  %s2 = scalar_lea.smem %s0, 1
  %s3 = sld [smem:[%s2]]
  %s4 = scalar_lea.smem %s0, 2
  %s5 = sld [smem:[%s4]]
  %s6 = scalar_lea.smem %s0, 3
  %s7 = sld [smem:[%s6]]
  %s8 = scalar_lea.smem %s0, 4
  %s9 = sld [smem:[%s8]]
  %s10 = scalar_lea.smem %s0, 5
  %s11 = sld [smem:[%s10]]
  %s12 = scalar_lea.smem %s0, 6
  %s13 = sld [smem:[%s12]]
  %s14 = scalar_lea.smem %s0, 7
  %s15 = sld [smem:[%s14]]
  %s16 = scalar_lea.smem %s0, 8
  %s17 = sld [smem:[%s16]]
  %s18 = scalar_lea.smem %s0, 9
  %s19 = sld [smem:[%s18]]
  %s20 = scalar_lea.smem %s0, 10
  %s21 = sld [smem:[%s20]]
  %s22 = scalar_lea.smem %s0, 11
  %s23 = sld [smem:[%s22]]
  %s24 = scalar_lea.smem %s0, 12
  %s25 = sld [smem:[%s24]]
  %s26 = scalar_lea.smem %s0, 13
  %s27 = sld [smem:[%s26]]
  %s28 = scalar_lea.smem %s0, 14
  %s29 = sld [smem:[%s28]]
  %s30 = scalar_lea.smem %s0, 15
  %s31 = sld [smem:[%s30]]
  %s32 = scalar_lea.smem %s0, 16
  %s33 = sld [smem:[%s32]]
  %s34 = scalar_lea.smem %s0, 17
  %s35 = sld [smem:[%s34]]
  %s36 = scalar_lea.smem %s0, 18
  %s37 = sld [smem:[%s36]]
  %s38 = scalar_lea.smem %s0, 19
  %s39 = sld [smem:[%s38]]
  %s40 = scalar_lea.smem %s0, 20
  %s41 = sld [smem:[%s40]]
  %s42 = scalar_lea.smem %s0, 21
  %s43 = sld [smem:[%s42]]
  %s44 = scalar_lea.smem %s0, 22
  %s45 = sld [smem:[%s44]]
  %s46 = scalar_lea.smem %s0, 23
  %s47 = sld [smem:[%s46]]
  %s48 = scalar_lea.smem %s0, 24
  %s49 = sld [smem:[%s48]]
  %s50 = scalar_lea.smem %s0, 25
  %s51 = sld [smem:[%s50]]
  %s52 = scalar_lea.smem %s0, 26
  %s53 = sld [smem:[%s52]]
  %s54 = scalar_lea.smem %s0, 27
  %s55 = sld [smem:[%s54]]
  %s56 = scalar_lea.smem %s0, 28
  %s57 = sld [smem:[%s56]]
  %s58 = scalar_lea.smem %s0, 29
  %s59 = sld [smem:[%s58]]
  %60 = xla_tuple %s55, %s57, %s59
  %s61 = sld [smem:[#allocation0]]
  $region190: #{tpu_custom_call.1} parent=0
    _
  %s63 = ssub.s32 1, %s61
  %s64 = scalar_select 0, %s63, %s61
  $region1: #{tpu_custom_call.1} parent=0
    #allocation2 [shape = 'u8[24576]{0}', space=vmem, size = 0x6000, scoped, tag = 'input window, operand 0, single buffered']
    #allocation3 [shape = 's32[1]{0}', space=sflag, size = 0x4, scoped, tag = 'scoped memory for tpu_custom_call.1']
    #allocation4 [shape = 's32[1]{0}', space=sflag, size = 0x4, scoped, tag = 'scoped memory for tpu_custom_call.1']
    #allocation5 [shape = 'u8[73728]{0}', space=vmem, size = 0x12000, scoped, tag = 'input window, operand 1, single buffered']
    #allocation6 [shape = 's32[1]{0}', space=sflag, size = 0x4, scoped, tag = 'scoped memory for tpu_custom_call.1']
    #allocation7 [shape = 'u8[65536]{0}', space=vmem, size = 0x10000, scoped, tag = 'input window, operand 2, single buffered']
    #allocation8 [shape = 'u8[65536]{0}', space=vmem, size = 0x10000, scoped, tag = 'input window, operand 3, single buffered']
    #allocation9 [shape = 's32[1]{0}', space=sflag, size = 0x4, scoped, tag = 'scoped memory for tpu_custom_call.1']
    #allocation10 [shape = 'u8[65536]{0}', space=vmem, size = 0x10000, scoped, tag = 'input window, operand 7, single buffered']
    #allocation11 [shape = 'u8[65536]{0}', space=vmem, size = 0x10000, scoped, tag = 'input window, operand 8, single buffered']
    #allocation12 [shape = 's32[1]{0}', space=sflag, size = 0x4, scoped, tag = 'scoped memory for tpu_custom_call.1']
    #allocation13 [shape = 'u8[65536]{0}', space=vmem, size = 0x10000, scoped, tag = 'input window, operand 9, single buffered']
    #allocation14 [shape = 'u8[65536]{0}', space=vmem, size = 0x10000, scoped, tag = 'input window, operand 10, single buffered']
    #allocation15 [shape = 's32[1]{0}', space=sflag, size = 0x4, scoped, tag = 'scoped memory for tpu_custom_call.1']
    #allocation16 [shape = 'u8[65536]{0}', space=vmem, size = 0x10000, scoped, tag = 'input window, operand 11, single buffered']
    #allocation17 [shape = 'u8[65536]{0}', space=vmem, size = 0x10000, scoped, tag = 'input window, operand 17, single buffered']
    #allocation18 [shape = 's32[1]{0}', space=sflag, size = 0x4, scoped, tag = 'scoped memory for tpu_custom_call.1']
    #allocation19 [shape = 'u8[65536]{0}', space=vmem, size = 0x10000, scoped, tag = 'input window, operand 18, single buffered']
    #allocation20 [shape = 'u8[65536]{0}', space=vmem, size = 0x10000, scoped, tag = 'input window, operand 19, single buffered']
    #allocation21 [shape = 's32[1]{0}', space=sflag, size = 0x4, scoped, tag = 'scoped memory for tpu_custom_call.1']
    #allocation22 [shape = 'u8[65536]{0}', space=vmem, size = 0x10000, scoped, tag = 'input window, operand 20, single buffered']
    #allocation23 [shape = 'u8[65536]{0}', space=vmem, size = 0x10000, scoped, tag = 'input window, operand 21, single buffered']
    #allocation24 [shape = 's32[1]{0}', space=sflag, size = 0x4, scoped, tag = 'scoped memory for tpu_custom_call.1']
    #allocation25 [shape = 'u8[12288]{0}', space=vmem, size = 0x3000, scoped, tag = 'output window, operand 0, single buffered']
    #allocation26 [shape = 'u8[12288]{0}', space=vmem, size = 0x3000, scoped, tag = 'output window, operand 1, single buffered']
    #allocation27 [shape = 's32[1]{0}', space=sflag, size = 0x4, scoped, tag = 'scoped memory for tpu_custom_call.1']
    #allocation28 [shape = 'u8[12288]{0}', space=vmem, size = 0x3000, scoped, tag = 'output window, operand 2, single buffered']
    %65 = vsyncpa [#allocation3], 0
    %66 = vsyncpa [#allocation6], 0
    %67 = vsyncpa [#allocation9], 0
    %68 = vsyncpa [#allocation12], 0
    %69 = vsyncpa [#allocation15], 0
    %70 = vsyncpa [#allocation18], 0
    %71 = vsyncpa [#allocation21], 0
    %72 = vsyncpa [#allocation24], 0
    %73 = vsyncpa [#allocation4], 0
    %74 = vsyncpa [#allocation27], 0
    // Predicated region
    $region2: #{tpu_custom_call.1} parent=1 // pred_check
      _
    $region3: #{tpu_custom_call.1} parent=1 // pred_check_branch
      %76 = sbr.rel (0) target = $region5
    $region4: #{tpu_custom_call.1} parent=1 // pred_region
      %s78 = ssub.s32 768, 768
      %79 = vsyncadd [#allocation3], %s78
      %s80 = sshll.u32 [#allocation2], 4
      %s81 = int_to_ptr.vmem [resolvable:$true] %s80
      %86 = dma.hbm_to_vmem [thread:$0]  %s1, 768, %s81, [#allocation3], 256, 256, 16
    $region5: #{tpu_custom_call.1} parent=1 // pred_fallthru
      _
    // Predicated region
    $region6: #{tpu_custom_call.1} parent=1 // pred_check
      _
    $region7: #{tpu_custom_call.1} parent=1 // pred_check_branch
      %88 = sbr.rel (0) target = $region9
    $region8: #{tpu_custom_call.1} parent=1 // pred_region
      %s90 = ssub.s32 2304, 2304
      %91 = vsyncadd [#allocation6], %s90
      %s92 = sshll.u32 [#allocation5], 4
      %s93 = int_to_ptr.vmem [resolvable:$true] %s92
      %98 = dma.hbm_to_vmem [thread:$0]  %s3, 2304, %s93, [#allocation6], 128, 128, 8
    $region9: #{tpu_custom_call.1} parent=1 // pred_fallthru
      _
    // Predicated region
    $region10: #{tpu_custom_call.1} parent=1 // pred_check
      _
    $region11: #{tpu_custom_call.1} parent=1 // pred_check_branch
      %100 = sbr.rel (0) target = $region13
    $region12: #{tpu_custom_call.1} parent=1 // pred_region
      %s102 = ssub.s32 2048, 2048
      %103 = vsyncadd [#allocation6], %s102
      %s104 = sshll.u32 [#allocation7], 4
      %s105 = int_to_ptr.vmem [resolvable:$true] %s104
      %110 = dma.hbm_to_vmem [thread:$0]  %s5, 2048, %s105, [#allocation6], 128, 128, 8
    $region13: #{tpu_custom_call.1} parent=1 // pred_fallthru
      _
    // Predicated region
    $region14: #{tpu_custom_call.1} parent=1 // pred_check
      _
    $region15: #{tpu_custom_call.1} parent=1 // pred_check_branch
      %112 = sbr.rel (0) target = $region17
    $region16: #{tpu_custom_call.1} parent=1 // pred_region
      %s114 = ssub.s32 2048, 2048
      %115 = vsyncadd [#allocation9], %s114
      %s116 = sshll.u32 [#allocation8], 4
      %s117 = int_to_ptr.vmem [resolvable:$true] %s116
      %122 = dma.hbm_to_vmem [thread:$0]  %s7, 2048, %s117, [#allocation9], 128, 128, 8
    $region17: #{tpu_custom_call.1} parent=1 // pred_fallthru
      _
    // Predicated region
    $region18: #{tpu_custom_call.1} parent=1 // pred_check
      _
    $region19: #{tpu_custom_call.1} parent=1 // pred_check_branch
      %124 = sbr.rel (0) target = $region21
    $region20: #{tpu_custom_call.1} parent=1 // pred_region
      _
    $region21: #{tpu_custom_call.1} parent=1 // pred_fallthru
      _
    // Predicated region
    $region22: #{tpu_custom_call.1} parent=1 // pred_check
      _
    $region23: #{tpu_custom_call.1} parent=1 // pred_check_branch
      %126 = sbr.rel (0) target = $region25
    $region24: #{tpu_custom_call.1} parent=1 // pred_region
      _
    $region25: #{tpu_custom_call.1} parent=1 // pred_fallthru
      _
    // Predicated region
    $region26: #{tpu_custom_call.1} parent=1 // pred_check
      _
    $region27: #{tpu_custom_call.1} parent=1 // pred_check_branch
      %128 = sbr.rel (0) target = $region29
    $region28: #{tpu_custom_call.1} parent=1 // pred_region
      _
    $region29: #{tpu_custom_call.1} parent=1 // pred_fallthru
      _
    // Predicated region
    $region30: #{tpu_custom_call.1} parent=1 // pred_check
      _
    $region31: #{tpu_custom_call.1} parent=1 // pred_check_branch
      %130 = sbr.rel (0) target = $region33
    $region32: #{tpu_custom_call.1} parent=1 // pred_region
      %s132 = ssub.s32 2048, 2048
      %133 = vsyncadd [#allocation9], %s132
      %s134 = sshll.u32 [#allocation10], 4
      %s135 = int_to_ptr.vmem [resolvable:$true] %s134
      %140 = dma.hbm_to_vmem [thread:$0]  %s15, 2048, %s135, [#allocation9], 128, 128, 8
    $region33: #{tpu_custom_call.1} parent=1 // pred_fallthru
      _
    // Predicated region
    $region34: #{tpu_custom_call.1} parent=1 // pred_check
      _
    $region35: #{tpu_custom_call.1} parent=1 // pred_check_branch
      %142 = sbr.rel (0) target = $region37
    $region36: #{tpu_custom_call.1} parent=1 // pred_region
      %s144 = ssub.s32 2048, 2048
      %145 = vsyncadd [#allocation12], %s144
      %s146 = sshll.u32 [#allocation11], 4
      %s147 = int_to_ptr.vmem [resolvable:$true] %s146
      %152 = dma.hbm_to_vmem [thread:$0]  %s17, 2048, %s147, [#allocation12], 128, 128, 8
    $region37: #{tpu_custom_call.1} parent=1 // pred_fallthru
      _
    // Predicated region
    $region38: #{tpu_custom_call.1} parent=1 // pred_check
      _
    $region39: #{tpu_custom_call.1} parent=1 // pred_check_branch
      %154 = sbr.rel (0) target = $region41
    $region40: #{tpu_custom_call.1} parent=1 // pred_region
      %s156 = ssub.s32 2048, 2048
      %157 = vsyncadd [#allocation12], %s156
      %s158 = sshll.u32 [#allocation13], 4
      %s159 = int_to_ptr.vmem [resolvable:$true] %s158
      %164 = dma.hbm_to_vmem [thread:$0]  %s19, 2048, %s159, [#allocation12], 128, 128, 8
    $region41: #{tpu_custom_call.1} parent=1 // pred_fallthru
      _
    // Predicated region
    $region42: #{tpu_custom_call.1} parent=1 // pred_check
      _
    $region43: #{tpu_custom_call.1} parent=1 // pred_check_branch
      %166 = sbr.rel (0) target = $region45
    $region44: #{tpu_custom_call.1} parent=1 // pred_region
      %s168 = ssub.s32 2048, 2048
      %169 = vsyncadd [#allocation15], %s168
      %s170 = sshll.u32 [#allocation14], 4
      %s171 = int_to_ptr.vmem [resolvable:$true] %s170
      %176 = dma.hbm_to_vmem [thread:$0]  %s21, 2048, %s171, [#allocation15], 128, 128, 8
    $region45: #{tpu_custom_call.1} parent=1 // pred_fallthru
      _
    // Predicated region
    $region46: #{tpu_custom_call.1} parent=1 // pred_check
      _
    $region47: #{tpu_custom_call.1} parent=1 // pred_check_branch
      %178 = sbr.rel (0) target = $region49
    $region48: #{tpu_custom_call.1} parent=1 // pred_region
      %s180 = ssub.s32 2048, 2048
      %181 = vsyncadd [#allocation15], %s180
      %s182 = sshll.u32 [#allocation16], 4
      %s183 = int_to_ptr.vmem [resolvable:$true] %s182
      %188 = dma.hbm_to_vmem [thread:$0]  %s23, 2048, %s183, [#allocation15], 128, 128, 8
    $region49: #{tpu_custom_call.1} parent=1 // pred_fallthru
      _
    // Predicated region
    $region50: #{tpu_custom_call.1} parent=1 // pred_check
      _
    $region51: #{tpu_custom_call.1} parent=1 // pred_check_branch
      %190 = sbr.rel (0) target = $region53
    $region52: #{tpu_custom_call.1} parent=1 // pred_region
      _
    $region53: #{tpu_custom_call.1} parent=1 // pred_fallthru
      _
    // Predicated region
    $region54: #{tpu_custom_call.1} parent=1 // pred_check
      _
    $region55: #{tpu_custom_call.1} parent=1 // pred_check_branch
      %192 = sbr.rel (0) target = $region57
    $region56: #{tpu_custom_call.1} parent=1 // pred_region
      _
    $region57: #{tpu_custom_call.1} parent=1 // pred_fallthru
      _
    // Predicated region
    $region58: #{tpu_custom_call.1} parent=1 // pred_check
      _
    $region59: #{tpu_custom_call.1} parent=1 // pred_check_branch
      %194 = sbr.rel (0) target = $region61
    $region60: #{tpu_custom_call.1} parent=1 // pred_region
      _
    $region61: #{tpu_custom_call.1} parent=1 // pred_fallthru
      _
    // Predicated region
    $region62: #{tpu_custom_call.1} parent=1 // pred_check
      _
    $region63: #{tpu_custom_call.1} parent=1 // pred_check_branch
      %196 = sbr.rel (0) target = $region65
    $region64: #{tpu_custom_call.1} parent=1 // pred_region
      _
    $region65: #{tpu_custom_call.1} parent=1 // pred_fallthru
      _
    // Predicated region
    $region66: #{tpu_custom_call.1} parent=1 // pred_check
      _
    $region67: #{tpu_custom_call.1} parent=1 // pred_check_branch
      %198 = sbr.rel (0) target = $region69
    $region68: #{tpu_custom_call.1} parent=1 // pred_region
      _
    $region69: #{tpu_custom_call.1} parent=1 // pred_fallthru
      _
    // Predicated region
    $region70: #{tpu_custom_call.1} parent=1 // pred_check
      _
    $region71: #{tpu_custom_call.1} parent=1 // pred_check_branch
      %200 = sbr.rel (0) target = $region73
    $region72: #{tpu_custom_call.1} parent=1 // pred_region
      %s202 = ssub.s32 2048, 2048
      %203 = vsyncadd [#allocation18], %s202
      %s204 = sshll.u32 [#allocation17], 4
      %s205 = int_to_ptr.vmem [resolvable:$true] %s204
      %210 = dma.hbm_to_vmem [thread:$0]  %s35, 2048, %s205, [#allocation18], 128, 128, 8
    $region73: #{tpu_custom_call.1} parent=1 // pred_fallthru
      _
    // Predicated region
    $region74: #{tpu_custom_call.1} parent=1 // pred_check
      _
    $region75: #{tpu_custom_call.1} parent=1 // pred_check_branch
      %212 = sbr.rel (0) target = $region77
    $region76: #{tpu_custom_call.1} parent=1 // pred_region
      %s214 = ssub.s32 2048, 2048
      %215 = vsyncadd [#allocation18], %s214
      %s216 = sshll.u32 [#allocation19], 4
      %s217 = int_to_ptr.vmem [resolvable:$true] %s216
      %222 = dma.hbm_to_vmem [thread:$0]  %s37, 2048, %s217, [#allocation18], 128, 128, 8
    $region77: #{tpu_custom_call.1} parent=1 // pred_fallthru
      _
    // Predicated region
    $region78: #{tpu_custom_call.1} parent=1 // pred_check
      _
    $region79: #{tpu_custom_call.1} parent=1 // pred_check_branch
      %224 = sbr.rel (0) target = $region81
    $region80: #{tpu_custom_call.1} parent=1 // pred_region
      %s226 = ssub.s32 2048, 2048
      %227 = vsyncadd [#allocation21], %s226
      %s228 = sshll.u32 [#allocation20], 4
      %s229 = int_to_ptr.vmem [resolvable:$true] %s228
      %234 = dma.hbm_to_vmem [thread:$0]  %s39, 2048, %s229, [#allocation21], 128, 128, 8
    $region81: #{tpu_custom_call.1} parent=1 // pred_fallthru
      _
    // Predicated region
    $region82: #{tpu_custom_call.1} parent=1 // pred_check
      _
    $region83: #{tpu_custom_call.1} parent=1 // pred_check_branch
      %236 = sbr.rel (0) target = $region85
    $region84: #{tpu_custom_call.1} parent=1 // pred_region
      %s238 = ssub.s32 2048, 2048
      %239 = vsyncadd [#allocation21], %s238
      %s240 = sshll.u32 [#allocation22], 4
      %s241 = int_to_ptr.vmem [resolvable:$true] %s240
      %246 = dma.hbm_to_vmem [thread:$0]  %s41, 2048, %s241, [#allocation21], 128, 128, 8
    $region85: #{tpu_custom_call.1} parent=1 // pred_fallthru
      _
    // Predicated region
    $region86: #{tpu_custom_call.1} parent=1 // pred_check
      _
    $region87: #{tpu_custom_call.1} parent=1 // pred_check_branch
      %248 = sbr.rel (0) target = $region89
    $region88: #{tpu_custom_call.1} parent=1 // pred_region
      %s250 = ssub.s32 2048, 2048
      %251 = vsyncadd [#allocation24], %s250
      %s252 = sshll.u32 [#allocation23], 4
      %s253 = int_to_ptr.vmem [resolvable:$true] %s252
      %258 = dma.hbm_to_vmem [thread:$0]  %s43, 2048, %s253, [#allocation24], 128, 128, 8
    $region89: #{tpu_custom_call.1} parent=1 // pred_fallthru
      _
    // Predicated region
    $region90: #{tpu_custom_call.1} parent=1 // pred_check
      _
    $region91: #{tpu_custom_call.1} parent=1 // pred_check_branch
      %260 = sbr.rel (0) target = $region93
    $region92: #{tpu_custom_call.1} parent=1 // pred_region
      _
    $region93: #{tpu_custom_call.1} parent=1 // pred_fallthru
      _
    // Predicated region
    $region94: #{tpu_custom_call.1} parent=1 // pred_check
      _
    $region95: #{tpu_custom_call.1} parent=1 // pred_check_branch
      %262 = sbr.rel (0) target = $region97
    $region96: #{tpu_custom_call.1} parent=1 // pred_region
      _
    $region97: #{tpu_custom_call.1} parent=1 // pred_fallthru
      _
    // Predicated region
    $region98: #{tpu_custom_call.1} parent=1 // pred_check
      _
    $region99: #{tpu_custom_call.1} parent=1 // pred_check_branch
      %264 = sbr.rel (0) target = $region101
    $region100: #{tpu_custom_call.1} parent=1 // pred_region
      _
    $region101: #{tpu_custom_call.1} parent=1 // pred_fallthru
      _
    // Predicated region
    $region102: #{tpu_custom_call.1} parent=1 // pred_check
      _
    $region103: #{tpu_custom_call.1} parent=1 // pred_check_branch
      %266 = sbr.rel (0) target = $region105
    $region104: #{tpu_custom_call.1} parent=1 // pred_region
      _
    $region105: #{tpu_custom_call.1} parent=1 // pred_fallthru
      _
    // Predicated region
    $region106: #{tpu_custom_call.1} parent=1 // pred_check
      _
    $region107: #{tpu_custom_call.1} parent=1 // pred_check_branch
      %268 = sbr.rel (0) target = $region109
    $region108: #{tpu_custom_call.1} parent=1 // pred_region
      _
    $region109: #{tpu_custom_call.1} parent=1 // pred_fallthru
      _
    // Predicated region
    $region110: #{tpu_custom_call.1} parent=1 // pred_check
      _
    $region111: #{tpu_custom_call.1} parent=1 // pred_check_branch
      %270 = sbr.rel (0) target = $region113
    $region112: #{tpu_custom_call.1} parent=1 // pred_region
      %271 = dma.done [#allocation3], 768
    $region113: #{tpu_custom_call.1} parent=1 // pred_fallthru
      _
    // Predicated region
    $region114: #{tpu_custom_call.1} parent=1 // pred_check
      _
    $region115: #{tpu_custom_call.1} parent=1 // pred_check_branch
      %273 = sbr.rel (0) target = $region117
    $region116: #{tpu_custom_call.1} parent=1 // pred_region
      %274 = dma.done [#allocation6], 2304
    $region117: #{tpu_custom_call.1} parent=1 // pred_fallthru
      _
    // Predicated region
    $region118: #{tpu_custom_call.1} parent=1 // pred_check
      _
    $region119: #{tpu_custom_call.1} parent=1 // pred_check_branch
      %276 = sbr.rel (0) target = $region121
    $region120: #{tpu_custom_call.1} parent=1 // pred_region
      %277 = dma.done [#allocation6], 2048
    $region121: #{tpu_custom_call.1} parent=1 // pred_fallthru
      _
    // Predicated region
    $region122: #{tpu_custom_call.1} parent=1 // pred_check
      _
    $region123: #{tpu_custom_call.1} parent=1 // pred_check_branch
      %279 = sbr.rel (0) target = $region125
    $region124: #{tpu_custom_call.1} parent=1 // pred_region
      %280 = dma.done [#allocation9], 2048
    $region125: #{tpu_custom_call.1} parent=1 // pred_fallthru
      _
    // Predicated region
    $region126: #{tpu_custom_call.1} parent=1 // pred_check
      _
    $region127: #{tpu_custom_call.1} parent=1 // pred_check_branch
      %282 = sbr.rel (0) target = $region129
    $region128: #{tpu_custom_call.1} parent=1 // pred_region
      %283 = dma.done [#allocation9], 2048
    $region129: #{tpu_custom_call.1} parent=1 // pred_fallthru
      _
    // Predicated region
    $region130: #{tpu_custom_call.1} parent=1 // pred_check
      _
    $region131: #{tpu_custom_call.1} parent=1 // pred_check_branch
      %285 = sbr.rel (0) target = $region133
    $region132: #{tpu_custom_call.1} parent=1 // pred_region
      %286 = dma.done [#allocation12], 2048
    $region133: #{tpu_custom_call.1} parent=1 // pred_fallthru
      _
    // Predicated region
    $region134: #{tpu_custom_call.1} parent=1 // pred_check
      _
    $region135: #{tpu_custom_call.1} parent=1 // pred_check_branch
      %288 = sbr.rel (0) target = $region137
    $region136: #{tpu_custom_call.1} parent=1 // pred_region
      %289 = dma.done [#allocation12], 2048
    $region137: #{tpu_custom_call.1} parent=1 // pred_fallthru
      _
    // Predicated region
    $region138: #{tpu_custom_call.1} parent=1 // pred_check
      _
    $region139: #{tpu_custom_call.1} parent=1 // pred_check_branch
      %291 = sbr.rel (0) target = $region141
    $region140: #{tpu_custom_call.1} parent=1 // pred_region
      %292 = dma.done [#allocation15], 2048
    $region141: #{tpu_custom_call.1} parent=1 // pred_fallthru
      _
    // Predicated region
    $region142: #{tpu_custom_call.1} parent=1 // pred_check
      _
    $region143: #{tpu_custom_call.1} parent=1 // pred_check_branch
      %294 = sbr.rel (0) target = $region145
    $region144: #{tpu_custom_call.1} parent=1 // pred_region
      %295 = dma.done [#allocation15], 2048
    $region145: #{tpu_custom_call.1} parent=1 // pred_fallthru
      _
    // Predicated region
    $region146: #{tpu_custom_call.1} parent=1 // pred_check
      _
    $region147: #{tpu_custom_call.1} parent=1 // pred_check_branch
      %297 = sbr.rel (0) target = $region149
    $region148: #{tpu_custom_call.1} parent=1 // pred_region
      %298 = dma.done [#allocation18], 2048
    $region149: #{tpu_custom_call.1} parent=1 // pred_fallthru
      _
    // Predicated region
    $region150: #{tpu_custom_call.1} parent=1 // pred_check
      _
    $region151: #{tpu_custom_call.1} parent=1 // pred_check_branch
      %300 = sbr.rel (0) target = $region153
    $region152: #{tpu_custom_call.1} parent=1 // pred_region
      %301 = dma.done [#allocation18], 2048
    $region153: #{tpu_custom_call.1} parent=1 // pred_fallthru
      _
    // Predicated region
    $region154: #{tpu_custom_call.1} parent=1 // pred_check
      _
    $region155: #{tpu_custom_call.1} parent=1 // pred_check_branch
      %303 = sbr.rel (0) target = $region157
    $region156: #{tpu_custom_call.1} parent=1 // pred_region
      %304 = dma.done [#allocation21], 2048
    $region157: #{tpu_custom_call.1} parent=1 // pred_fallthru
      _
    // Predicated region
    $region158: #{tpu_custom_call.1} parent=1 // pred_check
      _
    $region159: #{tpu_custom_call.1} parent=1 // pred_check_branch
      %306 = sbr.rel (0) target = $region161
    $region160: #{tpu_custom_call.1} parent=1 // pred_region
      %307 = dma.done [#allocation21], 2048
    $region161: #{tpu_custom_call.1} parent=1 // pred_fallthru
      _
    // Predicated region
    $region162: #{tpu_custom_call.1} parent=1 // pred_check
      _
    $region163: #{tpu_custom_call.1} parent=1 // pred_check_branch
      %309 = sbr.rel (0) target = $region165
    $region164: #{tpu_custom_call.1} parent=1 // pred_region
      %310 = dma.done [#allocation24], 2048
    $region165: #{tpu_custom_call.1} parent=1 // pred_fallthru
      _
    %v311 = vld [vmem:[#allocation2] sm:$0xff]
    %v312 = vld [vmem:[#allocation2 + $0x8] sm:$0xff]
    %v313 = vld [vmem:[#allocation2 + $0x10] sm:$0xff]
    %v314 = vld [vmem:[#allocation2 + $0x18] sm:$0xff]
    %v315 = vld [vmem:[#allocation2 + $0x20] sm:$0xff]
    %v316 = vld [vmem:[#allocation2 + $0x28] sm:$0xff]
    %v317 = vld [vmem:[#allocation5] sm:$0xff]
    %v318 = vld [vmem:[#allocation5 + $0x8] sm:$0xff]
    %v319 = vld [vmem:[#allocation5 + $0x10] sm:$0xff]
    %v320 = vld [vmem:[#allocation5 + $0x18] sm:$0xff]
    %v321 = vld [vmem:[#allocation5 + $0x20] sm:$0xff]
    %v322 = vld [vmem:[#allocation5 + $0x28] sm:$0xff]
    %v323 = vld [vmem:[#allocation5 + $0x30] sm:$0xff]
    %v324 = vld [vmem:[#allocation5 + $0x38] sm:$0xff]
    %v325 = vld [vmem:[#allocation5 + $0x40] sm:$0xff]
    %v326 = vld [vmem:[#allocation5 + $0x48] sm:$0xff]
    %v327 = vld [vmem:[#allocation5 + $0x50] sm:$0xff]
    %v328 = vld [vmem:[#allocation5 + $0x58] sm:$0xff]
    %v329 = vld [vmem:[#allocation5 + $0x60] sm:$0xff]
    %v330 = vld [vmem:[#allocation5 + $0x68] sm:$0xff]
    %v331 = vld [vmem:[#allocation5 + $0x70] sm:$0xff]
    %v332 = vld [vmem:[#allocation5 + $0x78] sm:$0xff]
    %v333 = vld [vmem:[#allocation5 + $0x80] sm:$0xff]
    %v334 = vld [vmem:[#allocation5 + $0x88] sm:$0xff]
    %v335 = vld [vmem:[%s9] sm:$0x1]
    %v337 = vlaneseq
    %v338 = vshrl.u32 %v337, 7
    %v339 = vsub.s32 0, %v338
    %v340 = vrot.slane %v335, %v339
    %vm342 = vcmask 130048
    %v344 = vsel %vm342, %v312, 0
    %v347 = vsel %vm342, %v314, 0
    %v350 = vsel %vm342, %v316, 0
    %352 = vmatprep.subr.mxu0 0.0
    %353 = vmatpush1.msra.mxu0 %v332
    %354 = vmatprep.subr.mxu0 0.0
    %355 = vmatpush1.msra.mxu0 %v331
    %356 = vmatprep.subr.mxu0 0.0
    %357 = vmatpush1.msra.mxu0 %v330
    %358 = vmatprep.subr.mxu0 0.0
    %359 = vmatpush1.msra.mxu0 %v329
    %360 = vmatprep.subr.mxu0 0.0
    %361 = vmatpush1.msra.mxu0 %v328
    %362 = vmatprep.subr.mxu0 0.0
    %363 = vmatpush1.msra.mxu0 %v327
    %364 = vmatprep.subr.mxu0 0.0
    %365 = vmatpush1.msra.mxu0 %v326
    %366 = vmatprep.subr.mxu0 0.0
    %367 = vmatpush1.msra.mxu0 %v325
    %368 = vmatprep.subr.mxu0 0.0
    %369 = vmatpush1.msra.mxu0 %v324
    %370 = vmatprep.subr.mxu0 0.0
    %371 = vmatpush1.msra.mxu0 %v323
    %372 = vmatprep.subr.mxu0 0.0
    %373 = vmatpush1.msra.mxu0 %v322
    %374 = vmatprep.subr.mxu0 0.0
    %375 = vmatpush1.msra.mxu0 %v321
    %376 = vmatprep.subr.mxu0 0.0
    %377 = vmatpush1.msra.mxu0 %v320
    %378 = vmatprep.subr.mxu0 0.0
    %379 = vmatpush1.msra.mxu0 %v319
    %380 = vmatprep.subr.mxu0 0.0
    %381 = vmatpush1.msra.mxu0 %v318
    %382 = vmatprep.subr.mxu0 0.0
    %383 = vmatpush1.msra.mxu0 %v317
    %384 = vmatprep.subr.mxu0 0.0
    %385 = vmatpush2.msra.mxu0 0.0
    %386 = vmatprep.subr.mxu0 0.0
    %387 = vmatpush2.msra.mxu0 0.0
    %388 = vmatprep.subr.mxu0 0.0
    %389 = vmatpush2.msra.mxu0 0.0
    %390 = vmatprep.subr.mxu0 0.0
    %391 = vmatpush2.msra.mxu0 0.0
    %392 = vmatprep.subr.mxu0 0.0
    %393 = vmatpush2.msra.mxu0 0.0
    %394 = vmatprep.subr.mxu0 0.0
    %395 = vmatpush2.msra.mxu0 0.0
    %396 = vmatprep.subr.mxu0 0.0
    %397 = vmatpush2.msra.mxu0 0.0
    %398 = vmatprep.subr.mxu0 0.0
    %399 = vmatpush2.msra.mxu0 0.0
    %400 = vmatprep.subr.mxu0 0.0
    %401 = vmatpush2.msra.mxu0 0.0
    %402 = vmatprep.subr.mxu0 0.0
    %403 = vmatpush2.msra.mxu0 0.0
    %404 = vmatprep.subr.mxu0 0.0
    %405 = vmatpush2.msra.mxu0 0.0
    %406 = vmatprep.subr.mxu0 0.0
    %407 = vmatpush2.msra.mxu0 0.0
    %408 = vmatprep.subr.mxu0 0.0
    %409 = vmatpush2.msra.mxu0 0.0
    %410 = vmatprep.subr.mxu0 0.0
    %411 = vmatpush2.msra.mxu0 0.0
    %412 = vmatprep.subr.mxu0 0.0
    %413 = vmatpush2.msra.mxu0 %v334
    %414 = vmatprep.subr.mxu0 0.0
    %415 = vmatpush2.msra.mxu0 %v333
    %416 = vmatprep.mubr.f32.mxu0 %v344
    %417 = vmatmul.mubr.f32.gmra.mxu0 %v311
    %v418 = vpop.f32.mrf.mxu0
    %v419 = vadd.f32 %v340, %v418
    %v420 = vpop.f32.mrf.mxu0
    %421 = vmatprep.mubr.f32.mxu0 %v347
    %422 = vmatmul.mubr.f32.gmra.mxu0 %v313
    %v423 = vpop.f32.mrf.mxu0
    %v424 = vadd.f32 %v340, %v423
    %v425 = vpop.f32.mrf.mxu0
    %426 = vmatprep.mubr.f32.mxu0 %v350
    %427 = vmatmul.mubr.f32.gmra.mxu0 %v315
    %v428 = vpop.f32.mrf.mxu0
    %v429 = vadd.f32 %v340, %v428
    %v430 = vpop.f32.mrf.mxu0
    %431 = vdwg.mxu0
    %v432 = vmax.f32 %v419, 0.0
    %v433 = vmax.f32 %v424, 0.0
    %v434 = vmax.f32 %v429, 0.0
    %v435 = vld [vmem:[#allocation7] sm:$0xff]
    %v436 = vld [vmem:[#allocation7 + $0x8] sm:$0xff]
    %v437 = vld [vmem:[#allocation7 + $0x10] sm:$0xff]
    %v438 = vld [vmem:[#allocation7 + $0x18] sm:$0xff]
    %v439 = vld [vmem:[#allocation7 + $0x20] sm:$0xff]
    %v440 = vld [vmem:[#allocation7 + $0x28] sm:$0xff]
    %v441 = vld [vmem:[#allocation7 + $0x30] sm:$0xff]
    %v442 = vld [vmem:[#allocation7 + $0x38] sm:$0xff]
    %v443 = vld [vmem:[#allocation7 + $0x40] sm:$0xff]
    %v444 = vld [vmem:[#allocation7 + $0x48] sm:$0xff]
    %v445 = vld [vmem:[#allocation7 + $0x50] sm:$0xff]
    %v446 = vld [vmem:[#allocation7 + $0x58] sm:$0xff]
    %v447 = vld [vmem:[#allocation7 + $0x60] sm:$0xff]
    %v448 = vld [vmem:[#allocation7 + $0x68] sm:$0xff]
    %v449 = vld [vmem:[#allocation7 + $0x70] sm:$0xff]
    %v450 = vld [vmem:[#allocation7 + $0x78] sm:$0xff]
    %v451 = vld [vmem:[%s11] sm:$0x1]
    %v453 = vlaneseq
    %v454 = vshrl.u32 %v453, 7
    %v455 = vsub.s32 0, %v454
    %v456 = vrot.slane %v451, %v455
    %458 = vmatprep.subr.mxu0 0.0
    %459 = vmatpush1.msra.mxu0 %v450
    %460 = vmatprep.subr.mxu0 0.0
    %461 = vmatpush1.msra.mxu0 %v449
    %462 = vmatprep.subr.mxu0 0.0
    %463 = vmatpush1.msra.mxu0 %v448
    %464 = vmatprep.subr.mxu0 0.0
    %465 = vmatpush1.msra.mxu0 %v447
    %466 = vmatprep.subr.mxu0 0.0
    %467 = vmatpush1.msra.mxu0 %v446
    %468 = vmatprep.subr.mxu0 0.0
    %469 = vmatpush1.msra.mxu0 %v445
    %470 = vmatprep.subr.mxu0 0.0
    %471 = vmatpush1.msra.mxu0 %v444
    %472 = vmatprep.subr.mxu0 0.0
    %473 = vmatpush1.msra.mxu0 %v443
    %474 = vmatprep.subr.mxu0 0.0
    %475 = vmatpush1.msra.mxu0 %v442
    %476 = vmatprep.subr.mxu0 0.0
    %477 = vmatpush1.msra.mxu0 %v441
    %478 = vmatprep.subr.mxu0 0.0
    %479 = vmatpush1.msra.mxu0 %v440
    %480 = vmatprep.subr.mxu0 0.0
    %481 = vmatpush1.msra.mxu0 %v439
    %482 = vmatprep.subr.mxu0 0.0
    %483 = vmatpush1.msra.mxu0 %v438
    %484 = vmatprep.subr.mxu0 0.0
    %485 = vmatpush1.msra.mxu0 %v437
    %486 = vmatprep.subr.mxu0 0.0
    %487 = vmatpush1.msra.mxu0 %v436
    %488 = vmatprep.subr.mxu0 0.0
    %489 = vmatpush1.msra.mxu0 %v435
    %490 = vmatprep.subr.mxu0 0.0
    %491 = vmatpush2.msra.mxu0 0.0
    %492 = vmatprep.subr.mxu0 0.0
    %493 = vmatpush2.msra.mxu0 0.0
    %494 = vmatprep.subr.mxu0 0.0
    %495 = vmatpush2.msra.mxu0 0.0
    %496 = vmatprep.subr.mxu0 0.0
    %497 = vmatpush2.msra.mxu0 0.0
    %498 = vmatprep.subr.mxu0 0.0
    %499 = vmatpush2.msra.mxu0 0.0
    %500 = vmatprep.subr.mxu0 0.0
    %501 = vmatpush2.msra.mxu0 0.0
    %502 = vmatprep.subr.mxu0 0.0
    %503 = vmatpush2.msra.mxu0 0.0
    %504 = vmatprep.subr.mxu0 0.0
    %505 = vmatpush2.msra.mxu0 0.0
    %506 = vmatprep.subr.mxu0 0.0
    %507 = vmatpush2.msra.mxu0 0.0
    %508 = vmatprep.subr.mxu0 0.0
    %509 = vmatpush2.msra.mxu0 0.0
    %510 = vmatprep.subr.mxu0 0.0
    %511 = vmatpush2.msra.mxu0 0.0
    %512 = vmatprep.subr.mxu0 0.0
    %513 = vmatpush2.msra.mxu0 0.0
    %514 = vmatprep.subr.mxu0 0.0
    %515 = vmatpush2.msra.mxu0 0.0
    %516 = vmatprep.subr.mxu0 0.0
    %517 = vmatpush2.msra.mxu0 0.0
    %518 = vmatprep.subr.mxu0 0.0
    %519 = vmatpush2.msra.mxu0 0.0
    %520 = vmatprep.subr.mxu0 0.0
    %521 = vmatpush2.msra.mxu0 0.0
    %522 = vmatprep.mubr.f32.mxu0 0.0
    %523 = vmatmul.mubr.f32.gmra.mxu0 %v432
    %v524 = vpop.f32.mrf.mxu0
    %v525 = vadd.f32 %v456, %v524
    %v526 = vpop.f32.mrf.mxu0
    %527 = vmatprep.mubr.f32.mxu0 0.0
    %528 = vmatmul.mubr.f32.gmra.mxu0 %v433
    %v529 = vpop.f32.mrf.mxu0
    %v530 = vadd.f32 %v456, %v529
    %v531 = vpop.f32.mrf.mxu0
    %532 = vmatprep.mubr.f32.mxu0 0.0
    %533 = vmatmul.mubr.f32.gmra.mxu0 %v434
    %v534 = vpop.f32.mrf.mxu0
    %v535 = vadd.f32 %v456, %v534
    %v536 = vpop.f32.mrf.mxu0
    %537 = vdwg.mxu0
    %v538 = vmax.f32 %v525, 0.0
    %v539 = vmax.f32 %v530, 0.0
    %v540 = vmax.f32 %v535, 0.0
    %v541 = vld [vmem:[#allocation8] sm:$0xff]
    %v542 = vld [vmem:[#allocation8 + $0x8] sm:$0xff]
    %v543 = vld [vmem:[#allocation8 + $0x10] sm:$0xff]
    %v544 = vld [vmem:[#allocation8 + $0x18] sm:$0xff]
    %v545 = vld [vmem:[#allocation8 + $0x20] sm:$0xff]
    %v546 = vld [vmem:[#allocation8 + $0x28] sm:$0xff]
    %v547 = vld [vmem:[#allocation8 + $0x30] sm:$0xff]
    %v548 = vld [vmem:[#allocation8 + $0x38] sm:$0xff]
    %v549 = vld [vmem:[#allocation8 + $0x40] sm:$0xff]
    %v550 = vld [vmem:[#allocation8 + $0x48] sm:$0xff]
    %v551 = vld [vmem:[#allocation8 + $0x50] sm:$0xff]
    %v552 = vld [vmem:[#allocation8 + $0x58] sm:$0xff]
    %v553 = vld [vmem:[#allocation8 + $0x60] sm:$0xff]
    %v554 = vld [vmem:[#allocation8 + $0x68] sm:$0xff]
    %v555 = vld [vmem:[#allocation8 + $0x70] sm:$0xff]
    %v556 = vld [vmem:[#allocation8 + $0x78] sm:$0xff]
    %v557 = vld [vmem:[%s13] sm:$0x1]
    %v559 = vlaneseq
    %v560 = vshrl.u32 %v559, 7
    %v561 = vsub.s32 0, %v560
    %v562 = vrot.slane %v557, %v561
    %564 = vmatprep.subr.mxu0 0.0
    %565 = vmatpush1.msra.mxu0 %v556
    %566 = vmatprep.subr.mxu0 0.0
    %567 = vmatpush1.msra.mxu0 %v555
    %568 = vmatprep.subr.mxu0 0.0
    %569 = vmatpush1.msra.mxu0 %v554
    %570 = vmatprep.subr.mxu0 0.0
    %571 = vmatpush1.msra.mxu0 %v553
    %572 = vmatprep.subr.mxu0 0.0
    %573 = vmatpush1.msra.mxu0 %v552
    %574 = vmatprep.subr.mxu0 0.0
    %575 = vmatpush1.msra.mxu0 %v551
    %576 = vmatprep.subr.mxu0 0.0
    %577 = vmatpush1.msra.mxu0 %v550
    %578 = vmatprep.subr.mxu0 0.0
    %579 = vmatpush1.msra.mxu0 %v549
    %580 = vmatprep.subr.mxu0 0.0
    %581 = vmatpush1.msra.mxu0 %v548
    %582 = vmatprep.subr.mxu0 0.0
    %583 = vmatpush1.msra.mxu0 %v547
    %584 = vmatprep.subr.mxu0 0.0
    %585 = vmatpush1.msra.mxu0 %v546
    %586 = vmatprep.subr.mxu0 0.0
    %587 = vmatpush1.msra.mxu0 %v545
    %588 = vmatprep.subr.mxu0 0.0
    %589 = vmatpush1.msra.mxu0 %v544
    %590 = vmatprep.subr.mxu0 0.0
    %591 = vmatpush1.msra.mxu0 %v543
    %592 = vmatprep.subr.mxu0 0.0
    %593 = vmatpush1.msra.mxu0 %v542
    %594 = vmatprep.subr.mxu0 0.0
    %595 = vmatpush1.msra.mxu0 %v541
    %596 = vmatprep.subr.mxu0 0.0
    %597 = vmatpush2.msra.mxu0 0.0
    %598 = vmatprep.subr.mxu0 0.0
    %599 = vmatpush2.msra.mxu0 0.0
    %600 = vmatprep.subr.mxu0 0.0
    %601 = vmatpush2.msra.mxu0 0.0
    %602 = vmatprep.subr.mxu0 0.0
    %603 = vmatpush2.msra.mxu0 0.0
    %604 = vmatprep.subr.mxu0 0.0
    %605 = vmatpush2.msra.mxu0 0.0
    %606 = vmatprep.subr.mxu0 0.0
    %607 = vmatpush2.msra.mxu0 0.0
    %608 = vmatprep.subr.mxu0 0.0
    %609 = vmatpush2.msra.mxu0 0.0
    %610 = vmatprep.subr.mxu0 0.0
    %611 = vmatpush2.msra.mxu0 0.0
    %612 = vmatprep.subr.mxu0 0.0
    %613 = vmatpush2.msra.mxu0 0.0
    %614 = vmatprep.subr.mxu0 0.0
    %615 = vmatpush2.msra.mxu0 0.0
    %616 = vmatprep.subr.mxu0 0.0
    %617 = vmatpush2.msra.mxu0 0.0
    %618 = vmatprep.subr.mxu0 0.0
    %619 = vmatpush2.msra.mxu0 0.0
    %620 = vmatprep.subr.mxu0 0.0
    %621 = vmatpush2.msra.mxu0 0.0
    %622 = vmatprep.subr.mxu0 0.0
    %623 = vmatpush2.msra.mxu0 0.0
    %624 = vmatprep.subr.mxu0 0.0
    %625 = vmatpush2.msra.mxu0 0.0
    %626 = vmatprep.subr.mxu0 0.0
    %627 = vmatpush2.msra.mxu0 0.0
    %628 = vmatprep.mubr.f32.mxu0 0.0
    %629 = vmatmul.mubr.f32.gmra.mxu0 %v538
    %v630 = vpop.f32.mrf.mxu0
    %v631 = vadd.f32 %v562, %v630
    %v632 = vpop.f32.mrf.mxu0
    %633 = vmatprep.mubr.f32.mxu0 0.0
    %634 = vmatmul.mubr.f32.gmra.mxu0 %v539
    %v635 = vpop.f32.mrf.mxu0
    %v636 = vadd.f32 %v562, %v635
    %v637 = vpop.f32.mrf.mxu0
    %638 = vmatprep.mubr.f32.mxu0 0.0
    %639 = vmatmul.mubr.f32.gmra.mxu0 %v540
    %v640 = vpop.f32.mrf.mxu0
    %v641 = vadd.f32 %v562, %v640
    %v642 = vpop.f32.mrf.mxu0
    %643 = vdwg.mxu0
    %v644 = vmax.f32 %v631, 0.0
    %v645 = vmax.f32 %v636, 0.0
    %v646 = vmax.f32 %v641, 0.0
    %647 = vst [vmem:[#allocation25] sm:$0xff] %v644
    %648 = vst [vmem:[#allocation25 + $0x8] sm:$0xff] %v645
    %649 = vst [vmem:[#allocation25 + $0x10] sm:$0xff] %v646
    %v650 = vld [vmem:[#allocation10] sm:$0xff]
    %v651 = vld [vmem:[#allocation10 + $0x8] sm:$0xff]
    %v652 = vld [vmem:[#allocation10 + $0x10] sm:$0xff]
    %v653 = vld [vmem:[#allocation10 + $0x18] sm:$0xff]
    %v654 = vld [vmem:[#allocation10 + $0x20] sm:$0xff]
    %v655 = vld [vmem:[#allocation10 + $0x28] sm:$0xff]
    %v656 = vld [vmem:[#allocation10 + $0x30] sm:$0xff]
    %v657 = vld [vmem:[#allocation10 + $0x38] sm:$0xff]
    %v658 = vld [vmem:[#allocation10 + $0x40] sm:$0xff]
    %v659 = vld [vmem:[#allocation10 + $0x48] sm:$0xff]
    %v660 = vld [vmem:[#allocation10 + $0x50] sm:$0xff]
    %v661 = vld [vmem:[#allocation10 + $0x58] sm:$0xff]
    %v662 = vld [vmem:[#allocation10 + $0x60] sm:$0xff]
    %v663 = vld [vmem:[#allocation10 + $0x68] sm:$0xff]
    %v664 = vld [vmem:[#allocation10 + $0x70] sm:$0xff]
    %v665 = vld [vmem:[#allocation10 + $0x78] sm:$0xff]
    %v666 = vld [vmem:[%s25] sm:$0x1]
    %v668 = vlaneseq
    %v669 = vshrl.u32 %v668, 7
    %v670 = vsub.s32 0, %v669
    %v671 = vrot.slane %v666, %v670
    %673 = vmatprep.subr.mxu0 0.0
    %674 = vmatpush1.msra.mxu0 %v665
    %675 = vmatprep.subr.mxu0 0.0
    %676 = vmatpush1.msra.mxu0 %v664
    %677 = vmatprep.subr.mxu0 0.0
    %678 = vmatpush1.msra.mxu0 %v663
    %679 = vmatprep.subr.mxu0 0.0
    %680 = vmatpush1.msra.mxu0 %v662
    %681 = vmatprep.subr.mxu0 0.0
    %682 = vmatpush1.msra.mxu0 %v661
    %683 = vmatprep.subr.mxu0 0.0
    %684 = vmatpush1.msra.mxu0 %v660
    %685 = vmatprep.subr.mxu0 0.0
    %686 = vmatpush1.msra.mxu0 %v659
    %687 = vmatprep.subr.mxu0 0.0
    %688 = vmatpush1.msra.mxu0 %v658
    %689 = vmatprep.subr.mxu0 0.0
    %690 = vmatpush1.msra.mxu0 %v657
    %691 = vmatprep.subr.mxu0 0.0
    %692 = vmatpush1.msra.mxu0 %v656
    %693 = vmatprep.subr.mxu0 0.0
    %694 = vmatpush1.msra.mxu0 %v655
    %695 = vmatprep.subr.mxu0 0.0
    %696 = vmatpush1.msra.mxu0 %v654
    %697 = vmatprep.subr.mxu0 0.0
    %698 = vmatpush1.msra.mxu0 %v653
    %699 = vmatprep.subr.mxu0 0.0
    %700 = vmatpush1.msra.mxu0 %v652
    %701 = vmatprep.subr.mxu0 0.0
    %702 = vmatpush1.msra.mxu0 %v651
    %703 = vmatprep.subr.mxu0 0.0
    %704 = vmatpush1.msra.mxu0 %v650
    %705 = vmatprep.subr.mxu0 0.0
    %706 = vmatpush2.msra.mxu0 0.0
    %707 = vmatprep.subr.mxu0 0.0
    %708 = vmatpush2.msra.mxu0 0.0
    %709 = vmatprep.subr.mxu0 0.0
    %710 = vmatpush2.msra.mxu0 0.0
    %711 = vmatprep.subr.mxu0 0.0
    %712 = vmatpush2.msra.mxu0 0.0
    %713 = vmatprep.subr.mxu0 0.0
    %714 = vmatpush2.msra.mxu0 0.0
    %715 = vmatprep.subr.mxu0 0.0
    %716 = vmatpush2.msra.mxu0 0.0
    %717 = vmatprep.subr.mxu0 0.0
    %718 = vmatpush2.msra.mxu0 0.0
    %719 = vmatprep.subr.mxu0 0.0
    %720 = vmatpush2.msra.mxu0 0.0
    %721 = vmatprep.subr.mxu0 0.0
    %722 = vmatpush2.msra.mxu0 0.0
    %723 = vmatprep.subr.mxu0 0.0
    %724 = vmatpush2.msra.mxu0 0.0
    %725 = vmatprep.subr.mxu0 0.0
    %726 = vmatpush2.msra.mxu0 0.0
    %727 = vmatprep.subr.mxu0 0.0
    %728 = vmatpush2.msra.mxu0 0.0
    %729 = vmatprep.subr.mxu0 0.0
    %730 = vmatpush2.msra.mxu0 0.0
    %731 = vmatprep.subr.mxu0 0.0
    %732 = vmatpush2.msra.mxu0 0.0
    %733 = vmatprep.subr.mxu0 0.0
    %734 = vmatpush2.msra.mxu0 0.0
    %735 = vmatprep.subr.mxu0 0.0
    %736 = vmatpush2.msra.mxu0 0.0
    %737 = vmatprep.mubr.f32.mxu0 0.0
    %738 = vmatmul.mubr.f32.gmra.mxu0 %v644
    %v739 = vpop.f32.mrf.mxu0
    %v740 = vadd.f32 %v671, %v739
    %v741 = vpop.f32.mrf.mxu0
    %742 = vmatprep.mubr.f32.mxu0 0.0
    %743 = vmatmul.mubr.f32.gmra.mxu0 %v645
    %v744 = vpop.f32.mrf.mxu0
    %v745 = vadd.f32 %v671, %v744
    %v746 = vpop.f32.mrf.mxu0
    %747 = vmatprep.mubr.f32.mxu0 0.0
    %748 = vmatmul.mubr.f32.gmra.mxu0 %v646
    %v749 = vpop.f32.mrf.mxu0
    %v750 = vadd.f32 %v671, %v749
    %v751 = vpop.f32.mrf.mxu0
    %752 = vdwg.mxu0
    %v753 = vmax.f32 %v740, 0.0
    %v754 = vmax.f32 %v745, 0.0
    %v755 = vmax.f32 %v750, 0.0
    %v756 = vld [vmem:[#allocation11] sm:$0xff]
    %v757 = vld [vmem:[#allocation11 + $0x8] sm:$0xff]
    %v758 = vld [vmem:[#allocation11 + $0x10] sm:$0xff]
    %v759 = vld [vmem:[#allocation11 + $0x18] sm:$0xff]
    %v760 = vld [vmem:[#allocation11 + $0x20] sm:$0xff]
    %v761 = vld [vmem:[#allocation11 + $0x28] sm:$0xff]
    %v762 = vld [vmem:[#allocation11 + $0x30] sm:$0xff]
    %v763 = vld [vmem:[#allocation11 + $0x38] sm:$0xff]
    %v764 = vld [vmem:[#allocation11 + $0x40] sm:$0xff]
    %v765 = vld [vmem:[#allocation11 + $0x48] sm:$0xff]
    %v766 = vld [vmem:[#allocation11 + $0x50] sm:$0xff]
    %v767 = vld [vmem:[#allocation11 + $0x58] sm:$0xff]
    %v768 = vld [vmem:[#allocation11 + $0x60] sm:$0xff]
    %v769 = vld [vmem:[#allocation11 + $0x68] sm:$0xff]
    %v770 = vld [vmem:[#allocation11 + $0x70] sm:$0xff]
    %v771 = vld [vmem:[#allocation11 + $0x78] sm:$0xff]
    %v772 = vld [vmem:[%s27] sm:$0x1]
    %v774 = vlaneseq
    %v775 = vshrl.u32 %v774, 7
    %v776 = vsub.s32 0, %v775
    %v777 = vrot.slane %v772, %v776
    %779 = vmatprep.subr.mxu0 0.0
    %780 = vmatpush1.msra.mxu0 %v771
    %781 = vmatprep.subr.mxu0 0.0
    %782 = vmatpush1.msra.mxu0 %v770
    %783 = vmatprep.subr.mxu0 0.0
    %784 = vmatpush1.msra.mxu0 %v769
    %785 = vmatprep.subr.mxu0 0.0
    %786 = vmatpush1.msra.mxu0 %v768
    %787 = vmatprep.subr.mxu0 0.0
    %788 = vmatpush1.msra.mxu0 %v767
    %789 = vmatprep.subr.mxu0 0.0
    %790 = vmatpush1.msra.mxu0 %v766
    %791 = vmatprep.subr.mxu0 0.0
    %792 = vmatpush1.msra.mxu0 %v765
    %793 = vmatprep.subr.mxu0 0.0
    %794 = vmatpush1.msra.mxu0 %v764
    %795 = vmatprep.subr.mxu0 0.0
    %796 = vmatpush1.msra.mxu0 %v763
    %797 = vmatprep.subr.mxu0 0.0
    %798 = vmatpush1.msra.mxu0 %v762
    %799 = vmatprep.subr.mxu0 0.0
    %800 = vmatpush1.msra.mxu0 %v761
    %801 = vmatprep.subr.mxu0 0.0
    %802 = vmatpush1.msra.mxu0 %v760
    %803 = vmatprep.subr.mxu0 0.0
    %804 = vmatpush1.msra.mxu0 %v759
    %805 = vmatprep.subr.mxu0 0.0
    %806 = vmatpush1.msra.mxu0 %v758
    %807 = vmatprep.subr.mxu0 0.0
    %808 = vmatpush1.msra.mxu0 %v757
    %809 = vmatprep.subr.mxu0 0.0
    %810 = vmatpush1.msra.mxu0 %v756
    %811 = vmatprep.subr.mxu0 0.0
    %812 = vmatpush2.msra.mxu0 0.0
    %813 = vmatprep.subr.mxu0 0.0
    %814 = vmatpush2.msra.mxu0 0.0
    %815 = vmatprep.subr.mxu0 0.0
    %816 = vmatpush2.msra.mxu0 0.0
    %817 = vmatprep.subr.mxu0 0.0
    %818 = vmatpush2.msra.mxu0 0.0
    %819 = vmatprep.subr.mxu0 0.0
    %820 = vmatpush2.msra.mxu0 0.0
    %821 = vmatprep.subr.mxu0 0.0
    %822 = vmatpush2.msra.mxu0 0.0
    %823 = vmatprep.subr.mxu0 0.0
    %824 = vmatpush2.msra.mxu0 0.0
    %825 = vmatprep.subr.mxu0 0.0
    %826 = vmatpush2.msra.mxu0 0.0
    %827 = vmatprep.subr.mxu0 0.0
    %828 = vmatpush2.msra.mxu0 0.0
    %829 = vmatprep.subr.mxu0 0.0
    %830 = vmatpush2.msra.mxu0 0.0
    %831 = vmatprep.subr.mxu0 0.0
    %832 = vmatpush2.msra.mxu0 0.0
    %833 = vmatprep.subr.mxu0 0.0
    %834 = vmatpush2.msra.mxu0 0.0
    %835 = vmatprep.subr.mxu0 0.0
    %836 = vmatpush2.msra.mxu0 0.0
    %837 = vmatprep.subr.mxu0 0.0
    %838 = vmatpush2.msra.mxu0 0.0
    %839 = vmatprep.subr.mxu0 0.0
    %840 = vmatpush2.msra.mxu0 0.0
    %841 = vmatprep.subr.mxu0 0.0
    %842 = vmatpush2.msra.mxu0 0.0
    %843 = vmatprep.mubr.f32.mxu0 0.0
    %844 = vmatmul.mubr.f32.gmra.mxu0 %v753
    %v845 = vpop.f32.mrf.mxu0
    %v846 = vadd.f32 %v777, %v845
    %v847 = vpop.f32.mrf.mxu0
    %848 = vmatprep.mubr.f32.mxu0 0.0
    %849 = vmatmul.mubr.f32.gmra.mxu0 %v754
    %v850 = vpop.f32.mrf.mxu0
    %v851 = vadd.f32 %v777, %v850
    %v852 = vpop.f32.mrf.mxu0
    %853 = vmatprep.mubr.f32.mxu0 0.0
    %854 = vmatmul.mubr.f32.gmra.mxu0 %v755
    %v855 = vpop.f32.mrf.mxu0
    %v856 = vadd.f32 %v777, %v855
    %v857 = vpop.f32.mrf.mxu0
    %858 = vdwg.mxu0
    %v859 = vmax.f32 %v846, 0.0
    %v860 = vmax.f32 %v851, 0.0
    %v861 = vmax.f32 %v856, 0.0
    %v862 = vld [vmem:[#allocation13] sm:$0xff]
    %v863 = vld [vmem:[#allocation13 + $0x8] sm:$0xff]
    %v864 = vld [vmem:[#allocation13 + $0x10] sm:$0xff]
    %v865 = vld [vmem:[#allocation13 + $0x18] sm:$0xff]
    %v866 = vld [vmem:[#allocation13 + $0x20] sm:$0xff]
    %v867 = vld [vmem:[#allocation13 + $0x28] sm:$0xff]
    %v868 = vld [vmem:[#allocation13 + $0x30] sm:$0xff]
    %v869 = vld [vmem:[#allocation13 + $0x38] sm:$0xff]
    %v870 = vld [vmem:[#allocation13 + $0x40] sm:$0xff]
    %v871 = vld [vmem:[#allocation13 + $0x48] sm:$0xff]
    %v872 = vld [vmem:[#allocation13 + $0x50] sm:$0xff]
    %v873 = vld [vmem:[#allocation13 + $0x58] sm:$0xff]
    %v874 = vld [vmem:[#allocation13 + $0x60] sm:$0xff]
    %v875 = vld [vmem:[#allocation13 + $0x68] sm:$0xff]
    %v876 = vld [vmem:[#allocation13 + $0x70] sm:$0xff]
    %v877 = vld [vmem:[#allocation13 + $0x78] sm:$0xff]
    %v878 = vld [vmem:[%s29] sm:$0x1]
    %v880 = vlaneseq
    %v881 = vshrl.u32 %v880, 7
    %v882 = vsub.s32 0, %v881
    %v883 = vrot.slane %v878, %v882
    %885 = vmatprep.subr.mxu0 0.0
    %886 = vmatpush1.msra.mxu0 %v877
    %887 = vmatprep.subr.mxu0 0.0
    %888 = vmatpush1.msra.mxu0 %v876
    %889 = vmatprep.subr.mxu0 0.0
    %890 = vmatpush1.msra.mxu0 %v875
    %891 = vmatprep.subr.mxu0 0.0
    %892 = vmatpush1.msra.mxu0 %v874
    %893 = vmatprep.subr.mxu0 0.0
    %894 = vmatpush1.msra.mxu0 %v873
    %895 = vmatprep.subr.mxu0 0.0
    %896 = vmatpush1.msra.mxu0 %v872
    %897 = vmatprep.subr.mxu0 0.0
    %898 = vmatpush1.msra.mxu0 %v871
    %899 = vmatprep.subr.mxu0 0.0
    %900 = vmatpush1.msra.mxu0 %v870
    %901 = vmatprep.subr.mxu0 0.0
    %902 = vmatpush1.msra.mxu0 %v869
    %903 = vmatprep.subr.mxu0 0.0
    %904 = vmatpush1.msra.mxu0 %v868
    %905 = vmatprep.subr.mxu0 0.0
    %906 = vmatpush1.msra.mxu0 %v867
    %907 = vmatprep.subr.mxu0 0.0
    %908 = vmatpush1.msra.mxu0 %v866
    %909 = vmatprep.subr.mxu0 0.0
    %910 = vmatpush1.msra.mxu0 %v865
    %911 = vmatprep.subr.mxu0 0.0
    %912 = vmatpush1.msra.mxu0 %v864
    %913 = vmatprep.subr.mxu0 0.0
    %914 = vmatpush1.msra.mxu0 %v863
    %915 = vmatprep.subr.mxu0 0.0
    %916 = vmatpush1.msra.mxu0 %v862
    %917 = vmatprep.subr.mxu0 0.0
    %918 = vmatpush2.msra.mxu0 0.0
    %919 = vmatprep.subr.mxu0 0.0
    %920 = vmatpush2.msra.mxu0 0.0
    %921 = vmatprep.subr.mxu0 0.0
    %922 = vmatpush2.msra.mxu0 0.0
    %923 = vmatprep.subr.mxu0 0.0
    %924 = vmatpush2.msra.mxu0 0.0
    %925 = vmatprep.subr.mxu0 0.0
    %926 = vmatpush2.msra.mxu0 0.0
    %927 = vmatprep.subr.mxu0 0.0
    %928 = vmatpush2.msra.mxu0 0.0
    %929 = vmatprep.subr.mxu0 0.0
    %930 = vmatpush2.msra.mxu0 0.0
    %931 = vmatprep.subr.mxu0 0.0
    %932 = vmatpush2.msra.mxu0 0.0
    %933 = vmatprep.subr.mxu0 0.0
    %934 = vmatpush2.msra.mxu0 0.0
    %935 = vmatprep.subr.mxu0 0.0
    %936 = vmatpush2.msra.mxu0 0.0
    %937 = vmatprep.subr.mxu0 0.0
    %938 = vmatpush2.msra.mxu0 0.0
    %939 = vmatprep.subr.mxu0 0.0
    %940 = vmatpush2.msra.mxu0 0.0
    %941 = vmatprep.subr.mxu0 0.0
    %942 = vmatpush2.msra.mxu0 0.0
    %943 = vmatprep.subr.mxu0 0.0
    %944 = vmatpush2.msra.mxu0 0.0
    %945 = vmatprep.subr.mxu0 0.0
    %946 = vmatpush2.msra.mxu0 0.0
    %947 = vmatprep.subr.mxu0 0.0
    %948 = vmatpush2.msra.mxu0 0.0
    %949 = vmatprep.mubr.f32.mxu0 0.0
    %950 = vmatmul.mubr.f32.gmra.mxu0 %v859
    %v951 = vpop.f32.mrf.mxu0
    %v952 = vadd.f32 %v883, %v951
    %v953 = vpop.f32.mrf.mxu0
    %954 = vmatprep.mubr.f32.mxu0 0.0
    %955 = vmatmul.mubr.f32.gmra.mxu0 %v860
    %v956 = vpop.f32.mrf.mxu0
    %v957 = vadd.f32 %v883, %v956
    %v958 = vpop.f32.mrf.mxu0
    %959 = vmatprep.mubr.f32.mxu0 0.0
    %960 = vmatmul.mubr.f32.gmra.mxu0 %v861
    %v961 = vpop.f32.mrf.mxu0
    %v962 = vadd.f32 %v883, %v961
    %v963 = vpop.f32.mrf.mxu0
    %964 = vdwg.mxu0
    %v965 = vmax.f32 %v952, 0.0
    %v966 = vmax.f32 %v957, 0.0
    %v967 = vmax.f32 %v962, 0.0
    %v968 = vld [vmem:[#allocation14] sm:$0xff]
    %v969 = vld [vmem:[#allocation14 + $0x8] sm:$0xff]
    %v970 = vld [vmem:[#allocation14 + $0x10] sm:$0xff]
    %v971 = vld [vmem:[#allocation14 + $0x18] sm:$0xff]
    %v972 = vld [vmem:[#allocation14 + $0x20] sm:$0xff]
    %v973 = vld [vmem:[#allocation14 + $0x28] sm:$0xff]
    %v974 = vld [vmem:[#allocation14 + $0x30] sm:$0xff]
    %v975 = vld [vmem:[#allocation14 + $0x38] sm:$0xff]
    %v976 = vld [vmem:[#allocation14 + $0x40] sm:$0xff]
    %v977 = vld [vmem:[#allocation14 + $0x48] sm:$0xff]
    %v978 = vld [vmem:[#allocation14 + $0x50] sm:$0xff]
    %v979 = vld [vmem:[#allocation14 + $0x58] sm:$0xff]
    %v980 = vld [vmem:[#allocation14 + $0x60] sm:$0xff]
    %v981 = vld [vmem:[#allocation14 + $0x68] sm:$0xff]
    %v982 = vld [vmem:[#allocation14 + $0x70] sm:$0xff]
    %v983 = vld [vmem:[#allocation14 + $0x78] sm:$0xff]
    %v984 = vld [vmem:[%s31] sm:$0x1]
    %v986 = vlaneseq
    %v987 = vshrl.u32 %v986, 7
    %v988 = vsub.s32 0, %v987
    %v989 = vrot.slane %v984, %v988
    %991 = vmatprep.subr.mxu0 0.0
    %992 = vmatpush1.msra.mxu0 %v983
    %993 = vmatprep.subr.mxu0 0.0
    %994 = vmatpush1.msra.mxu0 %v982
    %995 = vmatprep.subr.mxu0 0.0
    %996 = vmatpush1.msra.mxu0 %v981
    %997 = vmatprep.subr.mxu0 0.0
    %998 = vmatpush1.msra.mxu0 %v980
    %999 = vmatprep.subr.mxu0 0.0
    %1000 = vmatpush1.msra.mxu0 %v979
    %1001 = vmatprep.subr.mxu0 0.0
    %1002 = vmatpush1.msra.mxu0 %v978
    %1003 = vmatprep.subr.mxu0 0.0
    %1004 = vmatpush1.msra.mxu0 %v977
    %1005 = vmatprep.subr.mxu0 0.0
    %1006 = vmatpush1.msra.mxu0 %v976
    %1007 = vmatprep.subr.mxu0 0.0
    %1008 = vmatpush1.msra.mxu0 %v975
    %1009 = vmatprep.subr.mxu0 0.0
    %1010 = vmatpush1.msra.mxu0 %v974
    %1011 = vmatprep.subr.mxu0 0.0
    %1012 = vmatpush1.msra.mxu0 %v973
    %1013 = vmatprep.subr.mxu0 0.0
    %1014 = vmatpush1.msra.mxu0 %v972
    %1015 = vmatprep.subr.mxu0 0.0
    %1016 = vmatpush1.msra.mxu0 %v971
    %1017 = vmatprep.subr.mxu0 0.0
    %1018 = vmatpush1.msra.mxu0 %v970
    %1019 = vmatprep.subr.mxu0 0.0
    %1020 = vmatpush1.msra.mxu0 %v969
    %1021 = vmatprep.subr.mxu0 0.0
    %1022 = vmatpush1.msra.mxu0 %v968
    %1023 = vmatprep.subr.mxu0 0.0
    %1024 = vmatpush2.msra.mxu0 0.0
    %1025 = vmatprep.subr.mxu0 0.0
    %1026 = vmatpush2.msra.mxu0 0.0
    %1027 = vmatprep.subr.mxu0 0.0
    %1028 = vmatpush2.msra.mxu0 0.0
    %1029 = vmatprep.subr.mxu0 0.0
    %1030 = vmatpush2.msra.mxu0 0.0
    %1031 = vmatprep.subr.mxu0 0.0
    %1032 = vmatpush2.msra.mxu0 0.0
    %1033 = vmatprep.subr.mxu0 0.0
    %1034 = vmatpush2.msra.mxu0 0.0
    %1035 = vmatprep.subr.mxu0 0.0
    %1036 = vmatpush2.msra.mxu0 0.0
    %1037 = vmatprep.subr.mxu0 0.0
    %1038 = vmatpush2.msra.mxu0 0.0
    %1039 = vmatprep.subr.mxu0 0.0
    %1040 = vmatpush2.msra.mxu0 0.0
    %1041 = vmatprep.subr.mxu0 0.0
    %1042 = vmatpush2.msra.mxu0 0.0
    %1043 = vmatprep.subr.mxu0 0.0
    %1044 = vmatpush2.msra.mxu0 0.0
    %1045 = vmatprep.subr.mxu0 0.0
    %1046 = vmatpush2.msra.mxu0 0.0
    %1047 = vmatprep.subr.mxu0 0.0
    %1048 = vmatpush2.msra.mxu0 0.0
    %1049 = vmatprep.subr.mxu0 0.0
    %1050 = vmatpush2.msra.mxu0 0.0
    %1051 = vmatprep.subr.mxu0 0.0
    %1052 = vmatpush2.msra.mxu0 0.0
    %1053 = vmatprep.subr.mxu0 0.0
    %1054 = vmatpush2.msra.mxu0 0.0
    %1055 = vmatprep.mubr.f32.mxu0 0.0
    %1056 = vmatmul.mubr.f32.gmra.mxu0 %v965
    %v1057 = vpop.f32.mrf.mxu0
    %v1058 = vadd.f32 %v989, %v1057
    %v1059 = vpop.f32.mrf.mxu0
    %1060 = vmatprep.mubr.f32.mxu0 0.0
    %1061 = vmatmul.mubr.f32.gmra.mxu0 %v966
    %v1062 = vpop.f32.mrf.mxu0
    %v1063 = vadd.f32 %v989, %v1062
    %v1064 = vpop.f32.mrf.mxu0
    %1065 = vmatprep.mubr.f32.mxu0 0.0
    %1066 = vmatmul.mubr.f32.gmra.mxu0 %v967
    %v1067 = vpop.f32.mrf.mxu0
    %v1068 = vadd.f32 %v989, %v1067
    %v1069 = vpop.f32.mrf.mxu0
    %1070 = vdwg.mxu0
    %v1071 = vmax.f32 %v1058, 0.0
    %v1072 = vmax.f32 %v1063, 0.0
    %v1073 = vmax.f32 %v1068, 0.0
    %v1074 = vld [vmem:[#allocation16] sm:$0xff]
    %v1075 = vld [vmem:[#allocation16 + $0x8] sm:$0xff]
    %v1076 = vld [vmem:[#allocation16 + $0x10] sm:$0xff]
    %v1077 = vld [vmem:[#allocation16 + $0x18] sm:$0xff]
    %v1078 = vld [vmem:[#allocation16 + $0x20] sm:$0xff]
    %v1079 = vld [vmem:[#allocation16 + $0x28] sm:$0xff]
    %v1080 = vld [vmem:[#allocation16 + $0x30] sm:$0xff]
    %v1081 = vld [vmem:[#allocation16 + $0x38] sm:$0xff]
    %v1082 = vld [vmem:[#allocation16 + $0x40] sm:$0xff]
    %v1083 = vld [vmem:[#allocation16 + $0x48] sm:$0xff]
    %v1084 = vld [vmem:[#allocation16 + $0x50] sm:$0xff]
    %v1085 = vld [vmem:[#allocation16 + $0x58] sm:$0xff]
    %v1086 = vld [vmem:[#allocation16 + $0x60] sm:$0xff]
    %v1087 = vld [vmem:[#allocation16 + $0x68] sm:$0xff]
    %v1088 = vld [vmem:[#allocation16 + $0x70] sm:$0xff]
    %v1089 = vld [vmem:[#allocation16 + $0x78] sm:$0xff]
    %v1090 = vld [vmem:[%s33] sm:$0x1]
    %v1092 = vlaneseq
    %v1093 = vshrl.u32 %v1092, 7
    %v1094 = vsub.s32 0, %v1093
    %v1095 = vrot.slane %v1090, %v1094
    %1097 = vmatprep.subr.mxu0 0.0
    %1098 = vmatpush1.msra.mxu0 %v1089
    %1099 = vmatprep.subr.mxu0 0.0
    %1100 = vmatpush1.msra.mxu0 %v1088
    %1101 = vmatprep.subr.mxu0 0.0
    %1102 = vmatpush1.msra.mxu0 %v1087
    %1103 = vmatprep.subr.mxu0 0.0
    %1104 = vmatpush1.msra.mxu0 %v1086
    %1105 = vmatprep.subr.mxu0 0.0
    %1106 = vmatpush1.msra.mxu0 %v1085
    %1107 = vmatprep.subr.mxu0 0.0
    %1108 = vmatpush1.msra.mxu0 %v1084
    %1109 = vmatprep.subr.mxu0 0.0
    %1110 = vmatpush1.msra.mxu0 %v1083
    %1111 = vmatprep.subr.mxu0 0.0
    %1112 = vmatpush1.msra.mxu0 %v1082
    %1113 = vmatprep.subr.mxu0 0.0
    %1114 = vmatpush1.msra.mxu0 %v1081
    %1115 = vmatprep.subr.mxu0 0.0
    %1116 = vmatpush1.msra.mxu0 %v1080
    %1117 = vmatprep.subr.mxu0 0.0
    %1118 = vmatpush1.msra.mxu0 %v1079
    %1119 = vmatprep.subr.mxu0 0.0
    %1120 = vmatpush1.msra.mxu0 %v1078
    %1121 = vmatprep.subr.mxu0 0.0
    %1122 = vmatpush1.msra.mxu0 %v1077
    %1123 = vmatprep.subr.mxu0 0.0
    %1124 = vmatpush1.msra.mxu0 %v1076
    %1125 = vmatprep.subr.mxu0 0.0
    %1126 = vmatpush1.msra.mxu0 %v1075
    %1127 = vmatprep.subr.mxu0 0.0
    %1128 = vmatpush1.msra.mxu0 %v1074
    %1129 = vmatprep.subr.mxu0 0.0
    %1130 = vmatpush2.msra.mxu0 0.0
    %1131 = vmatprep.subr.mxu0 0.0
    %1132 = vmatpush2.msra.mxu0 0.0
    %1133 = vmatprep.subr.mxu0 0.0
    %1134 = vmatpush2.msra.mxu0 0.0
    %1135 = vmatprep.subr.mxu0 0.0
    %1136 = vmatpush2.msra.mxu0 0.0
    %1137 = vmatprep.subr.mxu0 0.0
    %1138 = vmatpush2.msra.mxu0 0.0
    %1139 = vmatprep.subr.mxu0 0.0
    %1140 = vmatpush2.msra.mxu0 0.0
    %1141 = vmatprep.subr.mxu0 0.0
    %1142 = vmatpush2.msra.mxu0 0.0
    %1143 = vmatprep.subr.mxu0 0.0
    %1144 = vmatpush2.msra.mxu0 0.0
    %1145 = vmatprep.subr.mxu0 0.0
    %1146 = vmatpush2.msra.mxu0 0.0
    %1147 = vmatprep.subr.mxu0 0.0
    %1148 = vmatpush2.msra.mxu0 0.0
    %1149 = vmatprep.subr.mxu0 0.0
    %1150 = vmatpush2.msra.mxu0 0.0
    %1151 = vmatprep.subr.mxu0 0.0
    %1152 = vmatpush2.msra.mxu0 0.0
    %1153 = vmatprep.subr.mxu0 0.0
    %1154 = vmatpush2.msra.mxu0 0.0
    %1155 = vmatprep.subr.mxu0 0.0
    %1156 = vmatpush2.msra.mxu0 0.0
    %1157 = vmatprep.subr.mxu0 0.0
    %1158 = vmatpush2.msra.mxu0 0.0
    %1159 = vmatprep.subr.mxu0 0.0
    %1160 = vmatpush2.msra.mxu0 0.0
    %1161 = vmatprep.mubr.f32.mxu0 0.0
    %1162 = vmatmul.mubr.f32.gmra.mxu0 %v1071
    %v1163 = vpop.f32.mrf.mxu0
    %v1164 = vadd.f32 %v1095, %v1163
    %v1165 = vpop.f32.mrf.mxu0
    %1166 = vmatprep.mubr.f32.mxu0 0.0
    %1167 = vmatmul.mubr.f32.gmra.mxu0 %v1072
    %v1168 = vpop.f32.mrf.mxu0
    %v1169 = vadd.f32 %v1095, %v1168
    %v1170 = vpop.f32.mrf.mxu0
    %1171 = vmatprep.mubr.f32.mxu0 0.0
    %1172 = vmatmul.mubr.f32.gmra.mxu0 %v1073
    %v1173 = vpop.f32.mrf.mxu0
    %v1174 = vadd.f32 %v1095, %v1173
    %v1175 = vpop.f32.mrf.mxu0
    %1176 = vdwg.mxu0
    %v1177 = vxor.u32 %v1164, 2147483648
    %v1178 = vxor.u32 %v1169, 2147483648
    %v1179 = vxor.u32 %v1174, 2147483648
    %v1180 = vmul.f32 %v1177, 1.442695
    %v1181 = vpow.pop %v1180
    %v1182 = vmul.f32 %v1178, 1.442695
    %v1183 = vpow.pop %v1182
    %v1184 = vmul.f32 %v1179, 1.442695
    %v1185 = vpow.pop %v1184
    %v1186 = vadd.f32 %v1181, 1.0
    %v1187 = vadd.f32 %v1183, 1.0
    %v1188 = vadd.f32 %v1185, 1.0
    %v1189 = vrcp.pop %v1186
    %v1190 = vmul.f32 1.0, %v1189
    %v1191 = vrcp.pop %v1187
    %v1192 = vmul.f32 1.0, %v1191
    %v1193 = vrcp.pop %v1188
    %v1194 = vmul.f32 1.0, %v1193
    %1195 = vst [vmem:[#allocation26] sm:$0xff] %v1190
    %1196 = vst [vmem:[#allocation26 + $0x8] sm:$0xff] %v1192
    %1197 = vst [vmem:[#allocation26 + $0x10] sm:$0xff] %v1194
    %v1198 = vld [vmem:[#allocation17] sm:$0xff]
    %v1199 = vld [vmem:[#allocation17 + $0x8] sm:$0xff]
    %v1200 = vld [vmem:[#allocation17 + $0x10] sm:$0xff]
    %v1201 = vld [vmem:[#allocation17 + $0x18] sm:$0xff]
    %v1202 = vld [vmem:[#allocation17 + $0x20] sm:$0xff]
    %v1203 = vld [vmem:[#allocation17 + $0x28] sm:$0xff]
    %v1204 = vld [vmem:[#allocation17 + $0x30] sm:$0xff]
    %v1205 = vld [vmem:[#allocation17 + $0x38] sm:$0xff]
    %v1206 = vld [vmem:[#allocation17 + $0x40] sm:$0xff]
    %v1207 = vld [vmem:[#allocation17 + $0x48] sm:$0xff]
    %v1208 = vld [vmem:[#allocation17 + $0x50] sm:$0xff]
    %v1209 = vld [vmem:[#allocation17 + $0x58] sm:$0xff]
    %v1210 = vld [vmem:[#allocation17 + $0x60] sm:$0xff]
    %v1211 = vld [vmem:[#allocation17 + $0x68] sm:$0xff]
    %v1212 = vld [vmem:[#allocation17 + $0x70] sm:$0xff]
    %v1213 = vld [vmem:[#allocation17 + $0x78] sm:$0xff]
    %v1214 = vld [vmem:[%s45] sm:$0x1]
    %v1216 = vlaneseq
    %v1217 = vshrl.u32 %v1216, 7
    %v1218 = vsub.s32 0, %v1217
    %v1219 = vrot.slane %v1214, %v1218
    %1221 = vmatprep.subr.mxu0 0.0
    %1222 = vmatpush1.msra.mxu0 %v1213
    %1223 = vmatprep.subr.mxu0 0.0
    %1224 = vmatpush1.msra.mxu0 %v1212
    %1225 = vmatprep.subr.mxu0 0.0
    %1226 = vmatpush1.msra.mxu0 %v1211
    %1227 = vmatprep.subr.mxu0 0.0
    %1228 = vmatpush1.msra.mxu0 %v1210
    %1229 = vmatprep.subr.mxu0 0.0
    %1230 = vmatpush1.msra.mxu0 %v1209
    %1231 = vmatprep.subr.mxu0 0.0
    %1232 = vmatpush1.msra.mxu0 %v1208
    %1233 = vmatprep.subr.mxu0 0.0
    %1234 = vmatpush1.msra.mxu0 %v1207
    %1235 = vmatprep.subr.mxu0 0.0
    %1236 = vmatpush1.msra.mxu0 %v1206
    %1237 = vmatprep.subr.mxu0 0.0
    %1238 = vmatpush1.msra.mxu0 %v1205
    %1239 = vmatprep.subr.mxu0 0.0
    %1240 = vmatpush1.msra.mxu0 %v1204
    %1241 = vmatprep.subr.mxu0 0.0
    %1242 = vmatpush1.msra.mxu0 %v1203
    %1243 = vmatprep.subr.mxu0 0.0
    %1244 = vmatpush1.msra.mxu0 %v1202
    %1245 = vmatprep.subr.mxu0 0.0
    %1246 = vmatpush1.msra.mxu0 %v1201
    %1247 = vmatprep.subr.mxu0 0.0
    %1248 = vmatpush1.msra.mxu0 %v1200
    %1249 = vmatprep.subr.mxu0 0.0
    %1250 = vmatpush1.msra.mxu0 %v1199
    %1251 = vmatprep.subr.mxu0 0.0
    %1252 = vmatpush1.msra.mxu0 %v1198
    %1253 = vmatprep.subr.mxu0 0.0
    %1254 = vmatpush2.msra.mxu0 0.0
    %1255 = vmatprep.subr.mxu0 0.0
    %1256 = vmatpush2.msra.mxu0 0.0
    %1257 = vmatprep.subr.mxu0 0.0
    %1258 = vmatpush2.msra.mxu0 0.0
    %1259 = vmatprep.subr.mxu0 0.0
    %1260 = vmatpush2.msra.mxu0 0.0
    %1261 = vmatprep.subr.mxu0 0.0
    %1262 = vmatpush2.msra.mxu0 0.0
    %1263 = vmatprep.subr.mxu0 0.0
    %1264 = vmatpush2.msra.mxu0 0.0
    %1265 = vmatprep.subr.mxu0 0.0
    %1266 = vmatpush2.msra.mxu0 0.0
    %1267 = vmatprep.subr.mxu0 0.0
    %1268 = vmatpush2.msra.mxu0 0.0
    %1269 = vmatprep.subr.mxu0 0.0
    %1270 = vmatpush2.msra.mxu0 0.0
    %1271 = vmatprep.subr.mxu0 0.0
    %1272 = vmatpush2.msra.mxu0 0.0
    %1273 = vmatprep.subr.mxu0 0.0
    %1274 = vmatpush2.msra.mxu0 0.0
    %1275 = vmatprep.subr.mxu0 0.0
    %1276 = vmatpush2.msra.mxu0 0.0
    %1277 = vmatprep.subr.mxu0 0.0
    %1278 = vmatpush2.msra.mxu0 0.0
    %1279 = vmatprep.subr.mxu0 0.0
    %1280 = vmatpush2.msra.mxu0 0.0
    %1281 = vmatprep.subr.mxu0 0.0
    %1282 = vmatpush2.msra.mxu0 0.0
    %1283 = vmatprep.subr.mxu0 0.0
    %1284 = vmatpush2.msra.mxu0 0.0
    %1285 = vmatprep.mubr.f32.mxu0 0.0
    %1286 = vmatmul.mubr.f32.gmra.mxu0 %v644
    %v1287 = vpop.f32.mrf.mxu0
    %v1288 = vadd.f32 %v1219, %v1287
    %v1289 = vpop.f32.mrf.mxu0
    %1290 = vmatprep.mubr.f32.mxu0 0.0
    %1291 = vmatmul.mubr.f32.gmra.mxu0 %v645
    %v1292 = vpop.f32.mrf.mxu0
    %v1293 = vadd.f32 %v1219, %v1292
    %v1294 = vpop.f32.mrf.mxu0
    %1295 = vmatprep.mubr.f32.mxu0 0.0
    %1296 = vmatmul.mubr.f32.gmra.mxu0 %v646
    %v1297 = vpop.f32.mrf.mxu0
    %v1298 = vadd.f32 %v1219, %v1297
    %v1299 = vpop.f32.mrf.mxu0
    %1300 = vdwg.mxu0
    %v1301 = vmax.f32 %v1288, 0.0
    %v1302 = vmax.f32 %v1293, 0.0
    %v1303 = vmax.f32 %v1298, 0.0
    %v1304 = vld [vmem:[#allocation19] sm:$0xff]
    %v1305 = vld [vmem:[#allocation19 + $0x8] sm:$0xff]
    %v1306 = vld [vmem:[#allocation19 + $0x10] sm:$0xff]
    %v1307 = vld [vmem:[#allocation19 + $0x18] sm:$0xff]
    %v1308 = vld [vmem:[#allocation19 + $0x20] sm:$0xff]
    %v1309 = vld [vmem:[#allocation19 + $0x28] sm:$0xff]
    %v1310 = vld [vmem:[#allocation19 + $0x30] sm:$0xff]
    %v1311 = vld [vmem:[#allocation19 + $0x38] sm:$0xff]
    %v1312 = vld [vmem:[#allocation19 + $0x40] sm:$0xff]
    %v1313 = vld [vmem:[#allocation19 + $0x48] sm:$0xff]
    %v1314 = vld [vmem:[#allocation19 + $0x50] sm:$0xff]
    %v1315 = vld [vmem:[#allocation19 + $0x58] sm:$0xff]
    %v1316 = vld [vmem:[#allocation19 + $0x60] sm:$0xff]
    %v1317 = vld [vmem:[#allocation19 + $0x68] sm:$0xff]
    %v1318 = vld [vmem:[#allocation19 + $0x70] sm:$0xff]
    %v1319 = vld [vmem:[#allocation19 + $0x78] sm:$0xff]
    %v1320 = vld [vmem:[%s47] sm:$0x1]
    %v1322 = vlaneseq
    %v1323 = vshrl.u32 %v1322, 7
    %v1324 = vsub.s32 0, %v1323
    %v1325 = vrot.slane %v1320, %v1324
    %1327 = vmatprep.subr.mxu0 0.0
    %1328 = vmatpush1.msra.mxu0 %v1319
    %1329 = vmatprep.subr.mxu0 0.0
    %1330 = vmatpush1.msra.mxu0 %v1318
    %1331 = vmatprep.subr.mxu0 0.0
    %1332 = vmatpush1.msra.mxu0 %v1317
    %1333 = vmatprep.subr.mxu0 0.0
    %1334 = vmatpush1.msra.mxu0 %v1316
    %1335 = vmatprep.subr.mxu0 0.0
    %1336 = vmatpush1.msra.mxu0 %v1315
    %1337 = vmatprep.subr.mxu0 0.0
    %1338 = vmatpush1.msra.mxu0 %v1314
    %1339 = vmatprep.subr.mxu0 0.0
    %1340 = vmatpush1.msra.mxu0 %v1313
    %1341 = vmatprep.subr.mxu0 0.0
    %1342 = vmatpush1.msra.mxu0 %v1312
    %1343 = vmatprep.subr.mxu0 0.0
    %1344 = vmatpush1.msra.mxu0 %v1311
    %1345 = vmatprep.subr.mxu0 0.0
    %1346 = vmatpush1.msra.mxu0 %v1310
    %1347 = vmatprep.subr.mxu0 0.0
    %1348 = vmatpush1.msra.mxu0 %v1309
    %1349 = vmatprep.subr.mxu0 0.0
    %1350 = vmatpush1.msra.mxu0 %v1308
    %1351 = vmatprep.subr.mxu0 0.0
    %1352 = vmatpush1.msra.mxu0 %v1307
    %1353 = vmatprep.subr.mxu0 0.0
    %1354 = vmatpush1.msra.mxu0 %v1306
    %1355 = vmatprep.subr.mxu0 0.0
    %1356 = vmatpush1.msra.mxu0 %v1305
    %1357 = vmatprep.subr.mxu0 0.0
    %1358 = vmatpush1.msra.mxu0 %v1304
    %1359 = vmatprep.subr.mxu0 0.0
    %1360 = vmatpush2.msra.mxu0 0.0
    %1361 = vmatprep.subr.mxu0 0.0
    %1362 = vmatpush2.msra.mxu0 0.0
    %1363 = vmatprep.subr.mxu0 0.0
    %1364 = vmatpush2.msra.mxu0 0.0
    %1365 = vmatprep.subr.mxu0 0.0
    %1366 = vmatpush2.msra.mxu0 0.0
    %1367 = vmatprep.subr.mxu0 0.0
    %1368 = vmatpush2.msra.mxu0 0.0
    %1369 = vmatprep.subr.mxu0 0.0
    %1370 = vmatpush2.msra.mxu0 0.0
    %1371 = vmatprep.subr.mxu0 0.0
    %1372 = vmatpush2.msra.mxu0 0.0
    %1373 = vmatprep.subr.mxu0 0.0
    %1374 = vmatpush2.msra.mxu0 0.0
    %1375 = vmatprep.subr.mxu0 0.0
    %1376 = vmatpush2.msra.mxu0 0.0
    %1377 = vmatprep.subr.mxu0 0.0
    %1378 = vmatpush2.msra.mxu0 0.0
    %1379 = vmatprep.subr.mxu0 0.0
    %1380 = vmatpush2.msra.mxu0 0.0
    %1381 = vmatprep.subr.mxu0 0.0
    %1382 = vmatpush2.msra.mxu0 0.0
    %1383 = vmatprep.subr.mxu0 0.0
    %1384 = vmatpush2.msra.mxu0 0.0
    %1385 = vmatprep.subr.mxu0 0.0
    %1386 = vmatpush2.msra.mxu0 0.0
    %1387 = vmatprep.subr.mxu0 0.0
    %1388 = vmatpush2.msra.mxu0 0.0
    %1389 = vmatprep.subr.mxu0 0.0
    %1390 = vmatpush2.msra.mxu0 0.0
    %1391 = vmatprep.mubr.f32.mxu0 0.0
    %1392 = vmatmul.mubr.f32.gmra.mxu0 %v1301
    %v1393 = vpop.f32.mrf.mxu0
    %v1394 = vadd.f32 %v1325, %v1393
    %v1395 = vpop.f32.mrf.mxu0
    %1396 = vmatprep.mubr.f32.mxu0 0.0
    %1397 = vmatmul.mubr.f32.gmra.mxu0 %v1302
    %v1398 = vpop.f32.mrf.mxu0
    %v1399 = vadd.f32 %v1325, %v1398
    %v1400 = vpop.f32.mrf.mxu0
    %1401 = vmatprep.mubr.f32.mxu0 0.0
    %1402 = vmatmul.mubr.f32.gmra.mxu0 %v1303
    %v1403 = vpop.f32.mrf.mxu0
    %v1404 = vadd.f32 %v1325, %v1403
    %v1405 = vpop.f32.mrf.mxu0
    %1406 = vdwg.mxu0
    %v1407 = vmax.f32 %v1394, 0.0
    %v1408 = vmax.f32 %v1399, 0.0
    %v1409 = vmax.f32 %v1404, 0.0
    %v1410 = vld [vmem:[#allocation20] sm:$0xff]
    %v1411 = vld [vmem:[#allocation20 + $0x8] sm:$0xff]
    %v1412 = vld [vmem:[#allocation20 + $0x10] sm:$0xff]
    %v1413 = vld [vmem:[#allocation20 + $0x18] sm:$0xff]
    %v1414 = vld [vmem:[#allocation20 + $0x20] sm:$0xff]
    %v1415 = vld [vmem:[#allocation20 + $0x28] sm:$0xff]
    %v1416 = vld [vmem:[#allocation20 + $0x30] sm:$0xff]
    %v1417 = vld [vmem:[#allocation20 + $0x38] sm:$0xff]
    %v1418 = vld [vmem:[#allocation20 + $0x40] sm:$0xff]
    %v1419 = vld [vmem:[#allocation20 + $0x48] sm:$0xff]
    %v1420 = vld [vmem:[#allocation20 + $0x50] sm:$0xff]
    %v1421 = vld [vmem:[#allocation20 + $0x58] sm:$0xff]
    %v1422 = vld [vmem:[#allocation20 + $0x60] sm:$0xff]
    %v1423 = vld [vmem:[#allocation20 + $0x68] sm:$0xff]
    %v1424 = vld [vmem:[#allocation20 + $0x70] sm:$0xff]
    %v1425 = vld [vmem:[#allocation20 + $0x78] sm:$0xff]
    %v1426 = vld [vmem:[%s49] sm:$0x1]
    %v1428 = vlaneseq
    %v1429 = vshrl.u32 %v1428, 7
    %v1430 = vsub.s32 0, %v1429
    %v1431 = vrot.slane %v1426, %v1430
    %1433 = vmatprep.subr.mxu0 0.0
    %1434 = vmatpush1.msra.mxu0 %v1425
    %1435 = vmatprep.subr.mxu0 0.0
    %1436 = vmatpush1.msra.mxu0 %v1424
    %1437 = vmatprep.subr.mxu0 0.0
    %1438 = vmatpush1.msra.mxu0 %v1423
    %1439 = vmatprep.subr.mxu0 0.0
    %1440 = vmatpush1.msra.mxu0 %v1422
    %1441 = vmatprep.subr.mxu0 0.0
    %1442 = vmatpush1.msra.mxu0 %v1421
    %1443 = vmatprep.subr.mxu0 0.0
    %1444 = vmatpush1.msra.mxu0 %v1420
    %1445 = vmatprep.subr.mxu0 0.0
    %1446 = vmatpush1.msra.mxu0 %v1419
    %1447 = vmatprep.subr.mxu0 0.0
    %1448 = vmatpush1.msra.mxu0 %v1418
    %1449 = vmatprep.subr.mxu0 0.0
    %1450 = vmatpush1.msra.mxu0 %v1417
    %1451 = vmatprep.subr.mxu0 0.0
    %1452 = vmatpush1.msra.mxu0 %v1416
    %1453 = vmatprep.subr.mxu0 0.0
    %1454 = vmatpush1.msra.mxu0 %v1415
    %1455 = vmatprep.subr.mxu0 0.0
    %1456 = vmatpush1.msra.mxu0 %v1414
    %1457 = vmatprep.subr.mxu0 0.0
    %1458 = vmatpush1.msra.mxu0 %v1413
    %1459 = vmatprep.subr.mxu0 0.0
    %1460 = vmatpush1.msra.mxu0 %v1412
    %1461 = vmatprep.subr.mxu0 0.0
    %1462 = vmatpush1.msra.mxu0 %v1411
    %1463 = vmatprep.subr.mxu0 0.0
    %1464 = vmatpush1.msra.mxu0 %v1410
    %1465 = vmatprep.subr.mxu0 0.0
    %1466 = vmatpush2.msra.mxu0 0.0
    %1467 = vmatprep.subr.mxu0 0.0
    %1468 = vmatpush2.msra.mxu0 0.0
    %1469 = vmatprep.subr.mxu0 0.0
    %1470 = vmatpush2.msra.mxu0 0.0
    %1471 = vmatprep.subr.mxu0 0.0
    %1472 = vmatpush2.msra.mxu0 0.0
    %1473 = vmatprep.subr.mxu0 0.0
    %1474 = vmatpush2.msra.mxu0 0.0
    %1475 = vmatprep.subr.mxu0 0.0
    %1476 = vmatpush2.msra.mxu0 0.0
    %1477 = vmatprep.subr.mxu0 0.0
    %1478 = vmatpush2.msra.mxu0 0.0
    %1479 = vmatprep.subr.mxu0 0.0
    %1480 = vmatpush2.msra.mxu0 0.0
    %1481 = vmatprep.subr.mxu0 0.0
    %1482 = vmatpush2.msra.mxu0 0.0
    %1483 = vmatprep.subr.mxu0 0.0
    %1484 = vmatpush2.msra.mxu0 0.0
    %1485 = vmatprep.subr.mxu0 0.0
    %1486 = vmatpush2.msra.mxu0 0.0
    %1487 = vmatprep.subr.mxu0 0.0
    %1488 = vmatpush2.msra.mxu0 0.0
    %1489 = vmatprep.subr.mxu0 0.0
    %1490 = vmatpush2.msra.mxu0 0.0
    %1491 = vmatprep.subr.mxu0 0.0
    %1492 = vmatpush2.msra.mxu0 0.0
    %1493 = vmatprep.subr.mxu0 0.0
    %1494 = vmatpush2.msra.mxu0 0.0
    %1495 = vmatprep.subr.mxu0 0.0
    %1496 = vmatpush2.msra.mxu0 0.0
    %1497 = vmatprep.mubr.f32.mxu0 0.0
    %1498 = vmatmul.mubr.f32.gmra.mxu0 %v1407
    %v1499 = vpop.f32.mrf.mxu0
    %v1500 = vadd.f32 %v1431, %v1499
    %v1501 = vpop.f32.mrf.mxu0
    %1502 = vmatprep.mubr.f32.mxu0 0.0
    %1503 = vmatmul.mubr.f32.gmra.mxu0 %v1408
    %v1504 = vpop.f32.mrf.mxu0
    %v1505 = vadd.f32 %v1431, %v1504
    %v1506 = vpop.f32.mrf.mxu0
    %1507 = vmatprep.mubr.f32.mxu0 0.0
    %1508 = vmatmul.mubr.f32.gmra.mxu0 %v1409
    %v1509 = vpop.f32.mrf.mxu0
    %v1510 = vadd.f32 %v1431, %v1509
    %v1511 = vpop.f32.mrf.mxu0
    %1512 = vdwg.mxu0
    %v1513 = vmax.f32 %v1500, 0.0
    %v1514 = vmax.f32 %v1505, 0.0
    %v1515 = vmax.f32 %v1510, 0.0
    %v1516 = vld [vmem:[#allocation22] sm:$0xff]
    %v1517 = vld [vmem:[#allocation22 + $0x8] sm:$0xff]
    %v1518 = vld [vmem:[#allocation22 + $0x10] sm:$0xff]
    %v1519 = vld [vmem:[#allocation22 + $0x18] sm:$0xff]
    %v1520 = vld [vmem:[#allocation22 + $0x20] sm:$0xff]
    %v1521 = vld [vmem:[#allocation22 + $0x28] sm:$0xff]
    %v1522 = vld [vmem:[#allocation22 + $0x30] sm:$0xff]
    %v1523 = vld [vmem:[#allocation22 + $0x38] sm:$0xff]
    %v1524 = vld [vmem:[#allocation22 + $0x40] sm:$0xff]
    %v1525 = vld [vmem:[#allocation22 + $0x48] sm:$0xff]
    %v1526 = vld [vmem:[#allocation22 + $0x50] sm:$0xff]
    %v1527 = vld [vmem:[#allocation22 + $0x58] sm:$0xff]
    %v1528 = vld [vmem:[#allocation22 + $0x60] sm:$0xff]
    %v1529 = vld [vmem:[#allocation22 + $0x68] sm:$0xff]
    %v1530 = vld [vmem:[#allocation22 + $0x70] sm:$0xff]
    %v1531 = vld [vmem:[#allocation22 + $0x78] sm:$0xff]
    %v1532 = vld [vmem:[%s51] sm:$0x1]
    %v1534 = vlaneseq
    %v1535 = vshrl.u32 %v1534, 7
    %v1536 = vsub.s32 0, %v1535
    %v1537 = vrot.slane %v1532, %v1536
    %1539 = vmatprep.subr.mxu0 0.0
    %1540 = vmatpush1.msra.mxu0 %v1531
    %1541 = vmatprep.subr.mxu0 0.0
    %1542 = vmatpush1.msra.mxu0 %v1530
    %1543 = vmatprep.subr.mxu0 0.0
    %1544 = vmatpush1.msra.mxu0 %v1529
    %1545 = vmatprep.subr.mxu0 0.0
    %1546 = vmatpush1.msra.mxu0 %v1528
    %1547 = vmatprep.subr.mxu0 0.0
    %1548 = vmatpush1.msra.mxu0 %v1527
    %1549 = vmatprep.subr.mxu0 0.0
    %1550 = vmatpush1.msra.mxu0 %v1526
    %1551 = vmatprep.subr.mxu0 0.0
    %1552 = vmatpush1.msra.mxu0 %v1525
    %1553 = vmatprep.subr.mxu0 0.0
    %1554 = vmatpush1.msra.mxu0 %v1524
    %1555 = vmatprep.subr.mxu0 0.0
    %1556 = vmatpush1.msra.mxu0 %v1523
    %1557 = vmatprep.subr.mxu0 0.0
    %1558 = vmatpush1.msra.mxu0 %v1522
    %1559 = vmatprep.subr.mxu0 0.0
    %1560 = vmatpush1.msra.mxu0 %v1521
    %1561 = vmatprep.subr.mxu0 0.0
    %1562 = vmatpush1.msra.mxu0 %v1520
    %1563 = vmatprep.subr.mxu0 0.0
    %1564 = vmatpush1.msra.mxu0 %v1519
    %1565 = vmatprep.subr.mxu0 0.0
    %1566 = vmatpush1.msra.mxu0 %v1518
    %1567 = vmatprep.subr.mxu0 0.0
    %1568 = vmatpush1.msra.mxu0 %v1517
    %1569 = vmatprep.subr.mxu0 0.0
    %1570 = vmatpush1.msra.mxu0 %v1516
    %1571 = vmatprep.subr.mxu0 0.0
    %1572 = vmatpush2.msra.mxu0 0.0
    %1573 = vmatprep.subr.mxu0 0.0
    %1574 = vmatpush2.msra.mxu0 0.0
    %1575 = vmatprep.subr.mxu0 0.0
    %1576 = vmatpush2.msra.mxu0 0.0
    %1577 = vmatprep.subr.mxu0 0.0
    %1578 = vmatpush2.msra.mxu0 0.0
    %1579 = vmatprep.subr.mxu0 0.0
    %1580 = vmatpush2.msra.mxu0 0.0
    %1581 = vmatprep.subr.mxu0 0.0
    %1582 = vmatpush2.msra.mxu0 0.0
    %1583 = vmatprep.subr.mxu0 0.0
    %1584 = vmatpush2.msra.mxu0 0.0
    %1585 = vmatprep.subr.mxu0 0.0
    %1586 = vmatpush2.msra.mxu0 0.0
    %1587 = vmatprep.subr.mxu0 0.0
    %1588 = vmatpush2.msra.mxu0 0.0
    %1589 = vmatprep.subr.mxu0 0.0
    %1590 = vmatpush2.msra.mxu0 0.0
    %1591 = vmatprep.subr.mxu0 0.0
    %1592 = vmatpush2.msra.mxu0 0.0
    %1593 = vmatprep.subr.mxu0 0.0
    %1594 = vmatpush2.msra.mxu0 0.0
    %1595 = vmatprep.subr.mxu0 0.0
    %1596 = vmatpush2.msra.mxu0 0.0
    %1597 = vmatprep.subr.mxu0 0.0
    %1598 = vmatpush2.msra.mxu0 0.0
    %1599 = vmatprep.subr.mxu0 0.0
    %1600 = vmatpush2.msra.mxu0 0.0
    %1601 = vmatprep.subr.mxu0 0.0
    %1602 = vmatpush2.msra.mxu0 0.0
    %1603 = vmatprep.mubr.f32.mxu0 0.0
    %1604 = vmatmul.mubr.f32.gmra.mxu0 %v1513
    %v1605 = vpop.f32.mrf.mxu0
    %v1606 = vadd.f32 %v1537, %v1605
    %v1607 = vpop.f32.mrf.mxu0
    %1608 = vmatprep.mubr.f32.mxu0 0.0
    %1609 = vmatmul.mubr.f32.gmra.mxu0 %v1514
    %v1610 = vpop.f32.mrf.mxu0
    %v1611 = vadd.f32 %v1537, %v1610
    %v1612 = vpop.f32.mrf.mxu0
    %1613 = vmatprep.mubr.f32.mxu0 0.0
    %1614 = vmatmul.mubr.f32.gmra.mxu0 %v1515
    %v1615 = vpop.f32.mrf.mxu0
    %v1616 = vadd.f32 %v1537, %v1615
    %v1617 = vpop.f32.mrf.mxu0
    %1618 = vdwg.mxu0
    %v1619 = vmax.f32 %v1606, 0.0
    %v1620 = vmax.f32 %v1611, 0.0
    %v1621 = vmax.f32 %v1616, 0.0
    %v1622 = vld [vmem:[#allocation23] sm:$0xff]
    %v1623 = vld [vmem:[#allocation23 + $0x8] sm:$0xff]
    %v1624 = vld [vmem:[#allocation23 + $0x10] sm:$0xff]
    %v1625 = vld [vmem:[#allocation23 + $0x18] sm:$0xff]
    %v1626 = vld [vmem:[#allocation23 + $0x20] sm:$0xff]
    %v1627 = vld [vmem:[#allocation23 + $0x28] sm:$0xff]
    %v1628 = vld [vmem:[#allocation23 + $0x30] sm:$0xff]
    %v1629 = vld [vmem:[#allocation23 + $0x38] sm:$0xff]
    %v1630 = vld [vmem:[#allocation23 + $0x40] sm:$0xff]
    %v1631 = vld [vmem:[#allocation23 + $0x48] sm:$0xff]
    %v1632 = vld [vmem:[#allocation23 + $0x50] sm:$0xff]
    %v1633 = vld [vmem:[#allocation23 + $0x58] sm:$0xff]
    %v1634 = vld [vmem:[#allocation23 + $0x60] sm:$0xff]
    %v1635 = vld [vmem:[#allocation23 + $0x68] sm:$0xff]
    %v1636 = vld [vmem:[#allocation23 + $0x70] sm:$0xff]
    %v1637 = vld [vmem:[#allocation23 + $0x78] sm:$0xff]
    %v1638 = vld [vmem:[%s53] sm:$0x1]
    %v1640 = vlaneseq
    %v1641 = vshrl.u32 %v1640, 7
    %v1642 = vsub.s32 0, %v1641
    %v1643 = vrot.slane %v1638, %v1642
    %1645 = vmatprep.subr.mxu0 0.0
    %1646 = vmatpush1.msra.mxu0 %v1637
    %1647 = vmatprep.subr.mxu0 0.0
    %1648 = vmatpush1.msra.mxu0 %v1636
    %1649 = vmatprep.subr.mxu0 0.0
    %1650 = vmatpush1.msra.mxu0 %v1635
    %1651 = vmatprep.subr.mxu0 0.0
    %1652 = vmatpush1.msra.mxu0 %v1634
    %1653 = vmatprep.subr.mxu0 0.0
    %1654 = vmatpush1.msra.mxu0 %v1633
    %1655 = vmatprep.subr.mxu0 0.0
    %1656 = vmatpush1.msra.mxu0 %v1632
    %1657 = vmatprep.subr.mxu0 0.0
    %1658 = vmatpush1.msra.mxu0 %v1631
    %1659 = vmatprep.subr.mxu0 0.0
    %1660 = vmatpush1.msra.mxu0 %v1630
    %1661 = vmatprep.subr.mxu0 0.0
    %1662 = vmatpush1.msra.mxu0 %v1629
    %1663 = vmatprep.subr.mxu0 0.0
    %1664 = vmatpush1.msra.mxu0 %v1628
    %1665 = vmatprep.subr.mxu0 0.0
    %1666 = vmatpush1.msra.mxu0 %v1627
    %1667 = vmatprep.subr.mxu0 0.0
    %1668 = vmatpush1.msra.mxu0 %v1626
    %1669 = vmatprep.subr.mxu0 0.0
    %1670 = vmatpush1.msra.mxu0 %v1625
    %1671 = vmatprep.subr.mxu0 0.0
    %1672 = vmatpush1.msra.mxu0 %v1624
    %1673 = vmatprep.subr.mxu0 0.0
    %1674 = vmatpush1.msra.mxu0 %v1623
    %1675 = vmatprep.subr.mxu0 0.0
    %1676 = vmatpush1.msra.mxu0 %v1622
    %1677 = vmatprep.subr.mxu0 0.0
    %1678 = vmatpush2.msra.mxu0 0.0
    %1679 = vmatprep.subr.mxu0 0.0
    %1680 = vmatpush2.msra.mxu0 0.0
    %1681 = vmatprep.subr.mxu0 0.0
    %1682 = vmatpush2.msra.mxu0 0.0
    %1683 = vmatprep.subr.mxu0 0.0
    %1684 = vmatpush2.msra.mxu0 0.0
    %1685 = vmatprep.subr.mxu0 0.0
    %1686 = vmatpush2.msra.mxu0 0.0
    %1687 = vmatprep.subr.mxu0 0.0
    %1688 = vmatpush2.msra.mxu0 0.0
    %1689 = vmatprep.subr.mxu0 0.0
    %1690 = vmatpush2.msra.mxu0 0.0
    %1691 = vmatprep.subr.mxu0 0.0
    %1692 = vmatpush2.msra.mxu0 0.0
    %1693 = vmatprep.subr.mxu0 0.0
    %1694 = vmatpush2.msra.mxu0 0.0
    %1695 = vmatprep.subr.mxu0 0.0
    %1696 = vmatpush2.msra.mxu0 0.0
    %1697 = vmatprep.subr.mxu0 0.0
    %1698 = vmatpush2.msra.mxu0 0.0
    %1699 = vmatprep.subr.mxu0 0.0
    %1700 = vmatpush2.msra.mxu0 0.0
    %1701 = vmatprep.subr.mxu0 0.0
    %1702 = vmatpush2.msra.mxu0 0.0
    %1703 = vmatprep.subr.mxu0 0.0
    %1704 = vmatpush2.msra.mxu0 0.0
    %1705 = vmatprep.subr.mxu0 0.0
    %1706 = vmatpush2.msra.mxu0 0.0
    %1707 = vmatprep.subr.mxu0 0.0
    %1708 = vmatpush2.msra.mxu0 0.0
    %1709 = vmatprep.mubr.f32.mxu0 0.0
    %1710 = vmatmul.mubr.f32.gmra.mxu0 %v1619
    %v1711 = vpop.f32.mrf.mxu0
    %v1712 = vadd.f32 %v1643, %v1711
    %v1713 = vpop.f32.mrf.mxu0
    %1714 = vmatprep.mubr.f32.mxu0 0.0
    %1715 = vmatmul.mubr.f32.gmra.mxu0 %v1620
    %v1716 = vpop.f32.mrf.mxu0
    %v1717 = vadd.f32 %v1643, %v1716
    %v1718 = vpop.f32.mrf.mxu0
    %1719 = vmatprep.mubr.f32.mxu0 0.0
    %1720 = vmatmul.mubr.f32.gmra.mxu0 %v1621
    %v1721 = vpop.f32.mrf.mxu0
    %v1722 = vadd.f32 %v1643, %v1721
    %v1723 = vpop.f32.mrf.mxu0
    %1724 = vdwg.mxu0
    %1725 = vst [vmem:[#allocation28] sm:$0xff] %v1712
    %1726 = vst [vmem:[#allocation28 + $0x8] sm:$0xff] %v1717
    %1727 = vst [vmem:[#allocation28 + $0x10] sm:$0xff] %v1722
    // Predicated region
    $region166: #{tpu_custom_call.1} parent=1 // pred_check
      _
    $region167: #{tpu_custom_call.1} parent=1 // pred_check_branch
      %1729 = sbr.rel (0) target = $region169
    $region168: #{tpu_custom_call.1} parent=1 // pred_region
      %s1731 = ssub.s32 384, 384
      %1732 = vsyncadd [#allocation4], %s1731
      %s1733 = sshll.u32 [#allocation25], 4
      %s1734 = int_to_ptr.vmem [resolvable:$true] %s1733
      %1739 = dma.vmem_to_hbm [thread:$0]  %s1734, 384, %s55, [#allocation4], 128, 128, 8
    $region169: #{tpu_custom_call.1} parent=1 // pred_fallthru
      _
    // Predicated region
    $region170: #{tpu_custom_call.1} parent=1 // pred_check
      _
    $region171: #{tpu_custom_call.1} parent=1 // pred_check_branch
      %1741 = sbr.rel (0) target = $region173
    $region172: #{tpu_custom_call.1} parent=1 // pred_region
      %s1743 = ssub.s32 384, 384
      %1744 = vsyncadd [#allocation27], %s1743
      %s1745 = sshll.u32 [#allocation26], 4
      %s1746 = int_to_ptr.vmem [resolvable:$true] %s1745
      %1751 = dma.vmem_to_hbm [thread:$0]  %s1746, 384, %s57, [#allocation27], 128, 128, 8
    $region173: #{tpu_custom_call.1} parent=1 // pred_fallthru
      _
    // Predicated region
    $region174: #{tpu_custom_call.1} parent=1 // pred_check
      _
    $region175: #{tpu_custom_call.1} parent=1 // pred_check_branch
      %1753 = sbr.rel (0) target = $region177
    $region176: #{tpu_custom_call.1} parent=1 // pred_region
      %s1755 = ssub.s32 384, 384
      %1756 = vsyncadd [#allocation27], %s1755
      %s1757 = sshll.u32 [#allocation28], 4
      %s1758 = int_to_ptr.vmem [resolvable:$true] %s1757
      %1763 = dma.vmem_to_hbm [thread:$0]  %s1758, 384, %s59, [#allocation27], 128, 128, 8
    $region177: #{tpu_custom_call.1} parent=1 // pred_fallthru
      _
    // Predicated region
    $region178: #{tpu_custom_call.1} parent=1 // pred_check
      _
    $region179: #{tpu_custom_call.1} parent=1 // pred_check_branch
      %1765 = sbr.rel (0) target = $region181
    $region180: #{tpu_custom_call.1} parent=1 // pred_region
      %1766 = dma.done [#allocation4], 384
    $region181: #{tpu_custom_call.1} parent=1 // pred_fallthru
      _
    // Predicated region
    $region182: #{tpu_custom_call.1} parent=1 // pred_check
      _
    $region183: #{tpu_custom_call.1} parent=1 // pred_check_branch
      %1768 = sbr.rel (0) target = $region185
    $region184: #{tpu_custom_call.1} parent=1 // pred_region
      %1769 = dma.done [#allocation27], 384
    $region185: #{tpu_custom_call.1} parent=1 // pred_fallthru
      _
    // Predicated region
    $region186: #{tpu_custom_call.1} parent=1 // pred_check
      _
    $region187: #{tpu_custom_call.1} parent=1 // pred_check_branch
      %1771 = sbr.rel (0) target = $region189
    $region188: #{tpu_custom_call.1} parent=1 // pred_region
      %1772 = dma.done [#allocation27], 384
    $region189: #{tpu_custom_call.1} parent=1 // pred_fallthru
      _
    %1773 = vsyncpa [#allocation3], 1
    %1774 = vsyncpa [#allocation6], 1
    %1775 = vsyncpa [#allocation9], 1
    %1776 = vsyncpa [#allocation12], 1
    %1777 = vsyncpa [#allocation15], 1
    %1778 = vsyncpa [#allocation18], 1
    %1779 = vsyncpa [#allocation21], 1
    %1780 = vsyncpa [#allocation24], 1
    %1781 = vsyncpa [#allocation4], 1
    %1782 = vsyncpa [#allocation27], 1

</llo_original>
